<compile_context>
chip_gen: v6e
topology: v6e:2x2x1
jax: 0.10.0
libtpu: 0.0.40
codegen_flags: <defaults>
</compile_context>

<pallas_src>
import functools

import jax
import jax.numpy as jnp
from jax.experimental import pallas as pl
from jax.experimental.pallas import tpu as pltpu


def lstm_kernel(x_ref, wih_ref, whh_ref, b_ref, wout_ref, bout_ref, out_ref,
                *, batch_pad, seq_len, gate_pad):
    G = gate_pad  # per-gate lane slab width == padded hidden width (>=128)

    # Cast AFTER the DMA: x travels HBM->VMEM once as f32, no extra wrapper
    # pass writing a bf16 copy back to HBM.
    x = x_ref[...].astype(jnp.bfloat16)                              # (T*Bp, D)

    # Input-side gate projections for ALL timesteps in one MXU call, combined
    # bias folded in once.  Gate columns are pre-packed into 128-lane slabs in
    # the order [i | f | o | g].
    xg = jnp.dot(x, wih_ref[...],
                 preferred_element_type=jnp.float32) + b_ref[...]    # (T*Bp, 4G)
    # Time-major retiling: (T*Bp, 4G) -> (T, Bp, 4G).  Bp == 8 rows, so each
    # xg[t] below is a whole, contiguous sublane tile (no strided gather on
    # the serial per-step chain).
    xg = xg.reshape(seq_len, batch_pad, 4 * G)

    whh = whh_ref[...]                                               # (G, 4G) bf16

    h = jnp.zeros((batch_pad, G), jnp.float32)
    c = jnp.zeros((batch_pad, G), jnp.float32)
    # Padded lanes [H:G] of h/c stay exactly 0: their weights/bias are zero, so
    # gates=0 there -> i,f,o=0.5, g=0 -> c_pad stays 0 and h_pad stays 0.

    # seq_len is small & static: full unroll with static slices; h/c stay
    # vreg-carried (no per-step VMEM traffic, no grid overhead).
    # TODO(synk): for long T switch to lax.fori_loop(..., unroll=4..8) with xg
    # in VMEM scratch, and keep W_hh MXU-stationary (matmul_push_rhs/acc_lhs).
    for t in range(seq_len):
        gates = xg[t] + jnp.dot(h.astype(jnp.bfloat16), whh,
                                preferred_element_type=jnp.float32)  # (Bp, 4G)
        # Two EUP regions instead of four sub-width calls; all slices below are
        # 128-lane aligned full-vreg selects.
        sig = jax.nn.sigmoid(gates[:, :3 * G])                       # [i|f|o]
        g_t = jnp.tanh(gates[:, 3 * G:])                             # [g]
        i_g = sig[:, 0 * G:1 * G]
        f_g = sig[:, 1 * G:2 * G]
        o_g = sig[:, 2 * G:3 * G]
        c = f_g * c + i_g * g_t
        h = o_g * jnp.tanh(c)

    # Fused output layer on the last hidden state (lane-dense padded O).
    out = (jnp.dot(h.astype(jnp.bfloat16), wout_ref[...],
                   preferred_element_type=jnp.float32) + bout_ref[...])
    out_ref[...] = out.astype(out_ref.dtype)


def prepare_lstm_params(params, *, lanes=128):
    """One-time weight preparation (outside the per-call path).

    Transposes, reorders the PyTorch gate order (i,f,g,o) into [i|f|o|g],
    pads every gate and the hidden dim to a full 128-lane slab, pads the
    output dim to 128 lanes, and casts MXU operands to bf16.
    """
    w_ih, w_hh, b_ih, b_hh, w_out, b_out = (
        params["w_ih"], params["w_hh"], params["b_ih"],
        params["b_hh"], params["w_out"], params["b_out"])
    H = w_hh.shape[1]
    O = w_out.shape[0]
    G = -(-H // lanes) * lanes          # per-gate slab width (>= H, mult of 128)
    O_pad = -(-O // lanes) * lanes

    def pack_gates(w_t):
        # w_t: (rows, 4H), torch gate order [i,f,g,o] along columns.
        rows = w_t.shape[0]
        out = jnp.zeros((rows, 4 * G), w_t.dtype)
        for slab, tg in enumerate((0, 1, 3, 2)):        # slabs: [i|f|o|g]
            out = out.at[:, slab * G:slab * G + H].set(w_t[:, tg * H:(tg + 1) * H])
        return out

    wih_p = pack_gates(w_ih.T).astype(jnp.bfloat16)                  # (D, 4G)
    whh_p = jnp.pad(pack_gates(w_hh.T),
                    ((0, G - H), (0, 0))).astype(jnp.bfloat16)       # (G, 4G)
    bias_p = pack_gates((b_ih + b_hh).reshape(1, 4 * H)).astype(jnp.float32)
    wout_p = jnp.pad(w_out.T, ((0, G - H), (0, O_pad - O))).astype(jnp.bfloat16)
    bout_p = jnp.pad(b_out.reshape(1, O),
                     ((0, 0), (0, O_pad - O))).astype(jnp.float32)

    return {"wih": wih_p, "whh": whh_p, "bias": bias_p,
            "wout": wout_p, "bout": bout_p,
            "gate_pad": G, "hidden": H, "out_dim": O, "out_pad": O_pad}


def lstm_forward(inputs, prepared):
    """inputs: (B, T, D) float32.  Returns (B, O) float32."""
    B, T, D = inputs.shape
    G = prepared["gate_pad"]
    O = prepared["out_dim"]
    O_pad = prepared["out_pad"]
    Bp = max(8, -(-B // 8) * 8)          # sublane-pad batch to fill vregs / MXU M

    # Time-major + batch-pad in one small fused XLA op.  No f32->bf16 copy of
    # x in the wrapper (the cast happens in-kernel after the DMA).
    x_tm = jnp.pad(jnp.transpose(inputs, (1, 0, 2)),
                   ((0, 0), (0, Bp - B), (0, 0)))                    # (T, Bp, D)
    x2d = x_tm.reshape(T * Bp, D)

    kernel = functools.partial(lstm_kernel, batch_pad=Bp, seq_len=T, gate_pad=G)

    grid_spec = pltpu.PrefetchScalarGridSpec(
        num_scalar_prefetch=0,
        grid=(1,),  # whole recurrence inside one kernel invocation
        in_specs=[
            pl.BlockSpec((T * Bp, D), lambda i: (0, 0)),
            pl.BlockSpec((D, 4 * G), lambda i: (0, 0)),
            pl.BlockSpec((G, 4 * G), lambda i: (0, 0)),
            pl.BlockSpec((1, 4 * G), lambda i: (0, 0)),
            pl.BlockSpec((G, O_pad), lambda i: (0, 0)),
            pl.BlockSpec((1, O_pad), lambda i: (0, 0)),
        ],
        out_specs=pl.BlockSpec((Bp, O_pad), lambda i: (0, 0)),
    )

    out_pad = pl.pallas_call(
        kernel,
        out_shape=jax.ShapeDtypeStruct((Bp, O_pad), jnp.float32),
        grid_spec=grid_spec,
        compiler_params=pltpu.CompilerParams(
            dimension_semantics=("arbitrary",)),
    )(x2d, prepared["wih"], prepared["whh"], prepared["bias"],
      prepared["wout"], prepared["bout"])

    return out_pad[:B, :O]


def lstm_reference(inputs, params):
    """Pure-JAX f32 reference (PyTorch LSTM semantics, hidden0=None)."""
    w_ih, w_hh, b_ih, b_hh, w_out, b_out = (
        params["w_ih"], params["w_hh"], params["b_ih"],
        params["b_hh"], params["w_out"], params["b_out"])
    B, T, D = inputs.shape
    H = w_hh.shape[1]

    def step(carry, x_t):
        h, c = carry
        gates = x_t @ w_ih.T + b_ih + h @ w_hh.T + b_hh
        i = jax.nn.sigmoid(gates[:, 0 * H:1 * H])
        f = jax.nn.sigmoid(gates[:, 1 * H:2 * H])
        g = jnp.tanh(gates[:, 2 * H:3 * H])
        o = jax.nn.sigmoid(gates[:, 3 * H:4 * H])
        c = f * c + i * g
        h = o * jnp.tanh(c)
        return (h, c), None

    h0 = jnp.zeros((B, H), jnp.float32)
    c0 = jnp.zeros((B, H), jnp.float32)
    (h_last, _), _ = jax.lax.scan(step, (h0, c0),
                                  jnp.transpose(inputs, (1, 0, 2)))
    return h_last @ w_out.T + b_out


if __name__ == "__main__":
    # Small shapes consistent with the module's forward.
    B, T, D, H, O = 2, 8, 16, 32, 8

    key = jax.random.PRNGKey(0)
    ks = jax.random.split(key, 7)
    scale = 1.0 / jnp.sqrt(H)
    params = {
        "w_ih": jax.random.uniform(ks[0], (4 * H, D), jnp.float32, -scale, scale),
        "w_hh": jax.random.uniform(ks[1], (4 * H, H), jnp.float32, -scale, scale),
        "b_ih": jax.random.uniform(ks[2], (4 * H,), jnp.float32, -scale, scale),
        "b_hh": jax.random.uniform(ks[3], (4 * H,), jnp.float32, -scale, scale),
        "w_out": jax.random.uniform(ks[4], (O, H), jnp.float32, -scale, scale),
        "b_out": jax.random.uniform(ks[5], (O,), jnp.float32, -scale, scale),
    }
    inputs = jax.random.normal(ks[6], (B, T, D), jnp.float32)

    # Weight packing happens once, outside the per-call path.
    prepared = prepare_lstm_params(params)
    prepared = jax.tree_util.tree_map(
        lambda x: jax.block_until_ready(x) if isinstance(x, jax.Array) else x,
        prepared)

    out = lstm_forward(inputs, prepared)
    out = jax.block_until_ready(out)

    ref = lstm_reference(inputs, params)
    assert out.shape == (B, O)
    # Tolerance relaxed vs a pure-f32 kernel because MXU operands are bf16
    # (f32 accumulation); typical error is ~1e-2 or less at these shapes.
    assert jnp.allclose(out, ref, atol=5e-2, rtol=1e-2), (
        f"mismatch: max abs err = {jnp.max(jnp.abs(out - ref))}")

    print("KERNEL_OK")
</pallas_src>

<mosaic_0001>
module attributes {stable_mosaic.version = 11 : i64} {
  func.func @lstm_kernel(%arg0: i32, %arg1: memref<64x16xf32, #tpu.memory_space<vmem>>, %arg2: memref<16x512xbf16, #tpu.memory_space<vmem>>, %arg3: memref<128x512xbf16, #tpu.memory_space<vmem>>, %arg4: memref<1x512xf32, #tpu.memory_space<vmem>>, %arg5: memref<128x128xbf16, #tpu.memory_space<vmem>>, %arg6: memref<1x128xf32, #tpu.memory_space<vmem>>, %arg7: memref<8x128xf32, #tpu.memory_space<vmem>>) attributes {dimension_semantics = [#tpu.dimension_semantics<arbitrary>], iteration_bounds = array<i64: 1>, scalar_prefetch = 0 : i64, scratch_operands = 0 : i64, tpu.core_type = #tpu.core_type<tc>, window_params = [{pipeline_mode = #tpu.pipeline_mode<synchronous>, transform_indices = @transform_0, window_bounds = array<i64: 64, 16>}, {pipeline_mode = #tpu.pipeline_mode<synchronous>, transform_indices = @transform_1, window_bounds = array<i64: 16, 512>}, {pipeline_mode = #tpu.pipeline_mode<synchronous>, transform_indices = @transform_2, window_bounds = array<i64: 128, 512>}, {pipeline_mode = #tpu.pipeline_mode<synchronous>, transform_indices = @transform_3, window_bounds = array<i64: 1, 512>}, {pipeline_mode = #tpu.pipeline_mode<synchronous>, transform_indices = @transform_4, window_bounds = array<i64: 128, 128>}, {pipeline_mode = #tpu.pipeline_mode<synchronous>, transform_indices = @transform_5, window_bounds = array<i64: 1, 128>}, {pipeline_mode = #tpu.pipeline_mode<synchronous>, transform_indices = @transform_6, window_bounds = array<i64: 8, 128>}]} {
    %c0 = arith.constant 0 : index
    %c0_0 = arith.constant 0 : index
    %0 = vector.load %arg1[%c0, %c0_0] : memref<64x16xf32, #tpu.memory_space<vmem>>, vector<64x16xf32>
    %1 = arith.truncf %0 : vector<64x16xf32> to vector<64x16xbf16>
    %c0_1 = arith.constant 0 : index
    %c0_2 = arith.constant 0 : index
    %2 = vector.load %arg2[%c0_1, %c0_2] : memref<16x512xbf16, #tpu.memory_space<vmem>>, vector<16x512xbf16>
    %cst = arith.constant dense<0.000000e+00> : vector<64x512xf32>
    %3 = tpu.matmul %1, %2, %cst {dimension_numbers = #tpu.dot_dimension_numbers<[1], [0], [0], [1], [0, 0, 1, 1], [], []>} : vector<64x16xbf16>, vector<16x512xbf16>, vector<64x512xf32> -> vector<64x512xf32>
    %c0_3 = arith.constant 0 : index
    %c0_4 = arith.constant 0 : index
    %4 = vector.load %arg4[%c0_3, %c0_4] : memref<1x512xf32, #tpu.memory_space<vmem>>, vector<1x512xf32>
    %5 = vector.broadcast %4 : vector<1x512xf32> to vector<64x512xf32>
    %6 = arith.addf %3, %5 : vector<64x512xf32>
    %7 = vector.shape_cast %6 : vector<64x512xf32> to vector<8x8x512xf32>
    %c0_5 = arith.constant 0 : index
    %c0_6 = arith.constant 0 : index
    %8 = vector.load %arg3[%c0_5, %c0_6] : memref<128x512xbf16, #tpu.memory_space<vmem>>, vector<128x512xbf16>
    %cst_7 = arith.constant 0.000000e+00 : f32
    %9 = vector.broadcast %cst_7 : f32 to vector<8x128xf32>
    %cst_8 = arith.constant 0.000000e+00 : f32
    %10 = vector.broadcast %cst_8 : f32 to vector<8x128xf32>
    %11 = vector.extract_strided_slice %7 {offsets = [0, 0, 0], sizes = [1, 8, 512], strides = [1, 1, 1]} : vector<8x8x512xf32> to vector<1x8x512xf32>
    %12 = vector.shape_cast %11 : vector<1x8x512xf32> to vector<8x512xf32>
    %13 = arith.truncf %9 : vector<8x128xf32> to vector<8x128xbf16>
    %cst_9 = arith.constant dense<0.000000e+00> : vector<8x512xf32>
    %14 = tpu.matmul %13, %8, %cst_9 {dimension_numbers = #tpu.dot_dimension_numbers<[1], [0], [0], [1], [0, 0, 1, 1], [], []>} : vector<8x128xbf16>, vector<128x512xbf16>, vector<8x512xf32> -> vector<8x512xf32>
    %15 = arith.addf %12, %14 : vector<8x512xf32>
    %16 = vector.extract_strided_slice %15 {offsets = [0, 0], sizes = [8, 384], strides = [1, 1]} : vector<8x512xf32> to vector<8x384xf32>
    %17 = arith.negf %16 : vector<8x384xf32>
    %18 = math.exp %17 : vector<8x384xf32>
    %cst_10 = arith.constant 1.000000e+00 : f32
    %19 = vector.broadcast %cst_10 : f32 to vector<8x384xf32>
    %20 = arith.addf %19, %18 : vector<8x384xf32>
    %21 = arith.divf %19, %20 : vector<8x384xf32>
    %22 = vector.extract_strided_slice %15 {offsets = [0, 384], sizes = [8, 128], strides = [1, 1]} : vector<8x512xf32> to vector<8x128xf32>
    %23 = math.tanh %22 : vector<8x128xf32>
    %24 = vector.extract_strided_slice %21 {offsets = [0, 0], sizes = [8, 128], strides = [1, 1]} : vector<8x384xf32> to vector<8x128xf32>
    %25 = vector.extract_strided_slice %21 {offsets = [0, 128], sizes = [8, 128], strides = [1, 1]} : vector<8x384xf32> to vector<8x128xf32>
    %26 = vector.extract_strided_slice %21 {offsets = [0, 256], sizes = [8, 128], strides = [1, 1]} : vector<8x384xf32> to vector<8x128xf32>
    %27 = arith.mulf %25, %10 : vector<8x128xf32>
    %28 = arith.mulf %24, %23 : vector<8x128xf32>
    %29 = arith.addf %27, %28 : vector<8x128xf32>
    %30 = math.tanh %29 : vector<8x128xf32>
    %31 = arith.mulf %26, %30 : vector<8x128xf32>
    %32 = vector.extract_strided_slice %7 {offsets = [1, 0, 0], sizes = [1, 8, 512], strides = [1, 1, 1]} : vector<8x8x512xf32> to vector<1x8x512xf32>
    %33 = vector.shape_cast %32 : vector<1x8x512xf32> to vector<8x512xf32>
    %34 = arith.truncf %31 : vector<8x128xf32> to vector<8x128xbf16>
    %cst_11 = arith.constant dense<0.000000e+00> : vector<8x512xf32>
    %35 = tpu.matmul %34, %8, %cst_11 {dimension_numbers = #tpu.dot_dimension_numbers<[1], [0], [0], [1], [0, 0, 1, 1], [], []>} : vector<8x128xbf16>, vector<128x512xbf16>, vector<8x512xf32> -> vector<8x512xf32>
    %36 = arith.addf %33, %35 : vector<8x512xf32>
    %37 = vector.extract_strided_slice %36 {offsets = [0, 0], sizes = [8, 384], strides = [1, 1]} : vector<8x512xf32> to vector<8x384xf32>
    %38 = arith.negf %37 : vector<8x384xf32>
    %39 = math.exp %38 : vector<8x384xf32>
    %cst_12 = arith.constant 1.000000e+00 : f32
    %40 = vector.broadcast %cst_12 : f32 to vector<8x384xf32>
    %41 = arith.addf %40, %39 : vector<8x384xf32>
    %42 = arith.divf %40, %41 : vector<8x384xf32>
    %43 = vector.extract_strided_slice %36 {offsets = [0, 384], sizes = [8, 128], strides = [1, 1]} : vector<8x512xf32> to vector<8x128xf32>
    %44 = math.tanh %43 : vector<8x128xf32>
    %45 = vector.extract_strided_slice %42 {offsets = [0, 0], sizes = [8, 128], strides = [1, 1]} : vector<8x384xf32> to vector<8x128xf32>
    %46 = vector.extract_strided_slice %42 {offsets = [0, 128], sizes = [8, 128], strides = [1, 1]} : vector<8x384xf32> to vector<8x128xf32>
    %47 = vector.extract_strided_slice %42 {offsets = [0, 256], sizes = [8, 128], strides = [1, 1]} : vector<8x384xf32> to vector<8x128xf32>
    %48 = arith.mulf %46, %29 : vector<8x128xf32>
    %49 = arith.mulf %45, %44 : vector<8x128xf32>
    %50 = arith.addf %48, %49 : vector<8x128xf32>
    %51 = math.tanh %50 : vector<8x128xf32>
    %52 = arith.mulf %47, %51 : vector<8x128xf32>
    %53 = vector.extract_strided_slice %7 {offsets = [2, 0, 0], sizes = [1, 8, 512], strides = [1, 1, 1]} : vector<8x8x512xf32> to vector<1x8x512xf32>
    %54 = vector.shape_cast %53 : vector<1x8x512xf32> to vector<8x512xf32>
    %55 = arith.truncf %52 : vector<8x128xf32> to vector<8x128xbf16>
    %cst_13 = arith.constant dense<0.000000e+00> : vector<8x512xf32>
    %56 = tpu.matmul %55, %8, %cst_13 {dimension_numbers = #tpu.dot_dimension_numbers<[1], [0], [0], [1], [0, 0, 1, 1], [], []>} : vector<8x128xbf16>, vector<128x512xbf16>, vector<8x512xf32> -> vector<8x512xf32>
    %57 = arith.addf %54, %56 : vector<8x512xf32>
    %58 = vector.extract_strided_slice %57 {offsets = [0, 0], sizes = [8, 384], strides = [1, 1]} : vector<8x512xf32> to vector<8x384xf32>
    %59 = arith.negf %58 : vector<8x384xf32>
    %60 = math.exp %59 : vector<8x384xf32>
    %cst_14 = arith.constant 1.000000e+00 : f32
    %61 = vector.broadcast %cst_14 : f32 to vector<8x384xf32>
    %62 = arith.addf %61, %60 : vector<8x384xf32>
    %63 = arith.divf %61, %62 : vector<8x384xf32>
    %64 = vector.extract_strided_slice %57 {offsets = [0, 384], sizes = [8, 128], strides = [1, 1]} : vector<8x512xf32> to vector<8x128xf32>
    %65 = math.tanh %64 : vector<8x128xf32>
    %66 = vector.extract_strided_slice %63 {offsets = [0, 0], sizes = [8, 128], strides = [1, 1]} : vector<8x384xf32> to vector<8x128xf32>
    %67 = vector.extract_strided_slice %63 {offsets = [0, 128], sizes = [8, 128], strides = [1, 1]} : vector<8x384xf32> to vector<8x128xf32>
    %68 = vector.extract_strided_slice %63 {offsets = [0, 256], sizes = [8, 128], strides = [1, 1]} : vector<8x384xf32> to vector<8x128xf32>
    %69 = arith.mulf %67, %50 : vector<8x128xf32>
    %70 = arith.mulf %66, %65 : vector<8x128xf32>
    %71 = arith.addf %69, %70 : vector<8x128xf32>
    %72 = math.tanh %71 : vector<8x128xf32>
    %73 = arith.mulf %68, %72 : vector<8x128xf32>
    %74 = vector.extract_strided_slice %7 {offsets = [3, 0, 0], sizes = [1, 8, 512], strides = [1, 1, 1]} : vector<8x8x512xf32> to vector<1x8x512xf32>
    %75 = vector.shape_cast %74 : vector<1x8x512xf32> to vector<8x512xf32>
    %76 = arith.truncf %73 : vector<8x128xf32> to vector<8x128xbf16>
    %cst_15 = arith.constant dense<0.000000e+00> : vector<8x512xf32>
    %77 = tpu.matmul %76, %8, %cst_15 {dimension_numbers = #tpu.dot_dimension_numbers<[1], [0], [0], [1], [0, 0, 1, 1], [], []>} : vector<8x128xbf16>, vector<128x512xbf16>, vector<8x512xf32> -> vector<8x512xf32>
    %78 = arith.addf %75, %77 : vector<8x512xf32>
    %79 = vector.extract_strided_slice %78 {offsets = [0, 0], sizes = [8, 384], strides = [1, 1]} : vector<8x512xf32> to vector<8x384xf32>
    %80 = arith.negf %79 : vector<8x384xf32>
    %81 = math.exp %80 : vector<8x384xf32>
    %cst_16 = arith.constant 1.000000e+00 : f32
    %82 = vector.broadcast %cst_16 : f32 to vector<8x384xf32>
    %83 = arith.addf %82, %81 : vector<8x384xf32>
    %84 = arith.divf %82, %83 : vector<8x384xf32>
    %85 = vector.extract_strided_slice %78 {offsets = [0, 384], sizes = [8, 128], strides = [1, 1]} : vector<8x512xf32> to vector<8x128xf32>
    %86 = math.tanh %85 : vector<8x128xf32>
    %87 = vector.extract_strided_slice %84 {offsets = [0, 0], sizes = [8, 128], strides = [1, 1]} : vector<8x384xf32> to vector<8x128xf32>
    %88 = vector.extract_strided_slice %84 {offsets = [0, 128], sizes = [8, 128], strides = [1, 1]} : vector<8x384xf32> to vector<8x128xf32>
    %89 = vector.extract_strided_slice %84 {offsets = [0, 256], sizes = [8, 128], strides = [1, 1]} : vector<8x384xf32> to vector<8x128xf32>
    %90 = arith.mulf %88, %71 : vector<8x128xf32>
    %91 = arith.mulf %87, %86 : vector<8x128xf32>
    %92 = arith.addf %90, %91 : vector<8x128xf32>
    %93 = math.tanh %92 : vector<8x128xf32>
    %94 = arith.mulf %89, %93 : vector<8x128xf32>
    %95 = vector.extract_strided_slice %7 {offsets = [4, 0, 0], sizes = [1, 8, 512], strides = [1, 1, 1]} : vector<8x8x512xf32> to vector<1x8x512xf32>
    %96 = vector.shape_cast %95 : vector<1x8x512xf32> to vector<8x512xf32>
    %97 = arith.truncf %94 : vector<8x128xf32> to vector<8x128xbf16>
    %cst_17 = arith.constant dense<0.000000e+00> : vector<8x512xf32>
    %98 = tpu.matmul %97, %8, %cst_17 {dimension_numbers = #tpu.dot_dimension_numbers<[1], [0], [0], [1], [0, 0, 1, 1], [], []>} : vector<8x128xbf16>, vector<128x512xbf16>, vector<8x512xf32> -> vector<8x512xf32>
    %99 = arith.addf %96, %98 : vector<8x512xf32>
    %100 = vector.extract_strided_slice %99 {offsets = [0, 0], sizes = [8, 384], strides = [1, 1]} : vector<8x512xf32> to vector<8x384xf32>
    %101 = arith.negf %100 : vector<8x384xf32>
    %102 = math.exp %101 : vector<8x384xf32>
    %cst_18 = arith.constant 1.000000e+00 : f32
    %103 = vector.broadcast %cst_18 : f32 to vector<8x384xf32>
    %104 = arith.addf %103, %102 : vector<8x384xf32>
    %105 = arith.divf %103, %104 : vector<8x384xf32>
    %106 = vector.extract_strided_slice %99 {offsets = [0, 384], sizes = [8, 128], strides = [1, 1]} : vector<8x512xf32> to vector<8x128xf32>
    %107 = math.tanh %106 : vector<8x128xf32>
    %108 = vector.extract_strided_slice %105 {offsets = [0, 0], sizes = [8, 128], strides = [1, 1]} : vector<8x384xf32> to vector<8x128xf32>
    %109 = vector.extract_strided_slice %105 {offsets = [0, 128], sizes = [8, 128], strides = [1, 1]} : vector<8x384xf32> to vector<8x128xf32>
    %110 = vector.extract_strided_slice %105 {offsets = [0, 256], sizes = [8, 128], strides = [1, 1]} : vector<8x384xf32> to vector<8x128xf32>
    %111 = arith.mulf %109, %92 : vector<8x128xf32>
    %112 = arith.mulf %108, %107 : vector<8x128xf32>
    %113 = arith.addf %111, %112 : vector<8x128xf32>
    %114 = math.tanh %113 : vector<8x128xf32>
    %115 = arith.mulf %110, %114 : vector<8x128xf32>
    %116 = vector.extract_strided_slice %7 {offsets = [5, 0, 0], sizes = [1, 8, 512], strides = [1, 1, 1]} : vector<8x8x512xf32> to vector<1x8x512xf32>
    %117 = vector.shape_cast %116 : vector<1x8x512xf32> to vector<8x512xf32>
    %118 = arith.truncf %115 : vector<8x128xf32> to vector<8x128xbf16>
    %cst_19 = arith.constant dense<0.000000e+00> : vector<8x512xf32>
    %119 = tpu.matmul %118, %8, %cst_19 {dimension_numbers = #tpu.dot_dimension_numbers<[1], [0], [0], [1], [0, 0, 1, 1], [], []>} : vector<8x128xbf16>, vector<128x512xbf16>, vector<8x512xf32> -> vector<8x512xf32>
    %120 = arith.addf %117, %119 : vector<8x512xf32>
    %121 = vector.extract_strided_slice %120 {offsets = [0, 0], sizes = [8, 384], strides = [1, 1]} : vector<8x512xf32> to vector<8x384xf32>
    %122 = arith.negf %121 : vector<8x384xf32>
    %123 = math.exp %122 : vector<8x384xf32>
    %cst_20 = arith.constant 1.000000e+00 : f32
    %124 = vector.broadcast %cst_20 : f32 to vector<8x384xf32>
    %125 = arith.addf %124, %123 : vector<8x384xf32>
    %126 = arith.divf %124, %125 : vector<8x384xf32>
    %127 = vector.extract_strided_slice %120 {offsets = [0, 384], sizes = [8, 128], strides = [1, 1]} : vector<8x512xf32> to vector<8x128xf32>
    %128 = math.tanh %127 : vector<8x128xf32>
    %129 = vector.extract_strided_slice %126 {offsets = [0, 0], sizes = [8, 128], strides = [1, 1]} : vector<8x384xf32> to vector<8x128xf32>
    %130 = vector.extract_strided_slice %126 {offsets = [0, 128], sizes = [8, 128], strides = [1, 1]} : vector<8x384xf32> to vector<8x128xf32>
    %131 = vector.extract_strided_slice %126 {offsets = [0, 256], sizes = [8, 128], strides = [1, 1]} : vector<8x384xf32> to vector<8x128xf32>
    %132 = arith.mulf %130, %113 : vector<8x128xf32>
    %133 = arith.mulf %129, %128 : vector<8x128xf32>
    %134 = arith.addf %132, %133 : vector<8x128xf32>
    %135 = math.tanh %134 : vector<8x128xf32>
    %136 = arith.mulf %131, %135 : vector<8x128xf32>
    %137 = vector.extract_strided_slice %7 {offsets = [6, 0, 0], sizes = [1, 8, 512], strides = [1, 1, 1]} : vector<8x8x512xf32> to vector<1x8x512xf32>
    %138 = vector.shape_cast %137 : vector<1x8x512xf32> to vector<8x512xf32>
    %139 = arith.truncf %136 : vector<8x128xf32> to vector<8x128xbf16>
    %cst_21 = arith.constant dense<0.000000e+00> : vector<8x512xf32>
    %140 = tpu.matmul %139, %8, %cst_21 {dimension_numbers = #tpu.dot_dimension_numbers<[1], [0], [0], [1], [0, 0, 1, 1], [], []>} : vector<8x128xbf16>, vector<128x512xbf16>, vector<8x512xf32> -> vector<8x512xf32>
    %141 = arith.addf %138, %140 : vector<8x512xf32>
    %142 = vector.extract_strided_slice %141 {offsets = [0, 0], sizes = [8, 384], strides = [1, 1]} : vector<8x512xf32> to vector<8x384xf32>
    %143 = arith.negf %142 : vector<8x384xf32>
    %144 = math.exp %143 : vector<8x384xf32>
    %cst_22 = arith.constant 1.000000e+00 : f32
    %145 = vector.broadcast %cst_22 : f32 to vector<8x384xf32>
    %146 = arith.addf %145, %144 : vector<8x384xf32>
    %147 = arith.divf %145, %146 : vector<8x384xf32>
    %148 = vector.extract_strided_slice %141 {offsets = [0, 384], sizes = [8, 128], strides = [1, 1]} : vector<8x512xf32> to vector<8x128xf32>
    %149 = math.tanh %148 : vector<8x128xf32>
    %150 = vector.extract_strided_slice %147 {offsets = [0, 0], sizes = [8, 128], strides = [1, 1]} : vector<8x384xf32> to vector<8x128xf32>
    %151 = vector.extract_strided_slice %147 {offsets = [0, 128], sizes = [8, 128], strides = [1, 1]} : vector<8x384xf32> to vector<8x128xf32>
    %152 = vector.extract_strided_slice %147 {offsets = [0, 256], sizes = [8, 128], strides = [1, 1]} : vector<8x384xf32> to vector<8x128xf32>
    %153 = arith.mulf %151, %134 : vector<8x128xf32>
    %154 = arith.mulf %150, %149 : vector<8x128xf32>
    %155 = arith.addf %153, %154 : vector<8x128xf32>
    %156 = math.tanh %155 : vector<8x128xf32>
    %157 = arith.mulf %152, %156 : vector<8x128xf32>
    %158 = vector.extract_strided_slice %7 {offsets = [7, 0, 0], sizes = [1, 8, 512], strides = [1, 1, 1]} : vector<8x8x512xf32> to vector<1x8x512xf32>
    %159 = vector.shape_cast %158 : vector<1x8x512xf32> to vector<8x512xf32>
    %160 = arith.truncf %157 : vector<8x128xf32> to vector<8x128xbf16>
    %cst_23 = arith.constant dense<0.000000e+00> : vector<8x512xf32>
    %161 = tpu.matmul %160, %8, %cst_23 {dimension_numbers = #tpu.dot_dimension_numbers<[1], [0], [0], [1], [0, 0, 1, 1], [], []>} : vector<8x128xbf16>, vector<128x512xbf16>, vector<8x512xf32> -> vector<8x512xf32>
    %162 = arith.addf %159, %161 : vector<8x512xf32>
    %163 = vector.extract_strided_slice %162 {offsets = [0, 0], sizes = [8, 384], strides = [1, 1]} : vector<8x512xf32> to vector<8x384xf32>
    %164 = arith.negf %163 : vector<8x384xf32>
    %165 = math.exp %164 : vector<8x384xf32>
    %cst_24 = arith.constant 1.000000e+00 : f32
    %166 = vector.broadcast %cst_24 : f32 to vector<8x384xf32>
    %167 = arith.addf %166, %165 : vector<8x384xf32>
    %168 = arith.divf %166, %167 : vector<8x384xf32>
    %169 = vector.extract_strided_slice %162 {offsets = [0, 384], sizes = [8, 128], strides = [1, 1]} : vector<8x512xf32> to vector<8x128xf32>
    %170 = math.tanh %169 : vector<8x128xf32>
    %171 = vector.extract_strided_slice %168 {offsets = [0, 0], sizes = [8, 128], strides = [1, 1]} : vector<8x384xf32> to vector<8x128xf32>
    %172 = vector.extract_strided_slice %168 {offsets = [0, 128], sizes = [8, 128], strides = [1, 1]} : vector<8x384xf32> to vector<8x128xf32>
    %173 = vector.extract_strided_slice %168 {offsets = [0, 256], sizes = [8, 128], strides = [1, 1]} : vector<8x384xf32> to vector<8x128xf32>
    %174 = arith.mulf %172, %155 : vector<8x128xf32>
    %175 = arith.mulf %171, %170 : vector<8x128xf32>
    %176 = arith.addf %174, %175 : vector<8x128xf32>
    %177 = math.tanh %176 : vector<8x128xf32>
    %178 = arith.mulf %173, %177 : vector<8x128xf32>
    %179 = arith.truncf %178 : vector<8x128xf32> to vector<8x128xbf16>
    %c0_25 = arith.constant 0 : index
    %c0_26 = arith.constant 0 : index
    %180 = vector.load %arg5[%c0_25, %c0_26] : memref<128x128xbf16, #tpu.memory_space<vmem>>, vector<128x128xbf16>
    %cst_27 = arith.constant dense<0.000000e+00> : vector<8x128xf32>
    %181 = tpu.matmul %179, %180, %cst_27 {dimension_numbers = #tpu.dot_dimension_numbers<[1], [0], [0], [1], [0, 0, 1, 1], [], []>} : vector<8x128xbf16>, vector<128x128xbf16>, vector<8x128xf32> -> vector<8x128xf32>
    %c0_28 = arith.constant 0 : index
    %c0_29 = arith.constant 0 : index
    %182 = vector.load %arg6[%c0_28, %c0_29] : memref<1x128xf32, #tpu.memory_space<vmem>>, vector<1x128xf32>
    %183 = vector.broadcast %182 : vector<1x128xf32> to vector<8x128xf32>
    %184 = arith.addf %181, %183 : vector<8x128xf32>
    %c0_30 = arith.constant 0 : index
    %c0_31 = arith.constant 0 : index
    %185 = vector.load %arg7[%c0_30, %c0_31] : memref<8x128xf32, #tpu.memory_space<vmem>>, vector<8x128xf32>
    tpu.vector_store %arg7[%c0_30, %c0_31], %184 {strides = array<i32>} : memref<8x128xf32, #tpu.memory_space<vmem>>, vector<8x128xf32>,
    return
  }
  func.func @transform_0(%arg0: i32) -> (i32, i32) {
    %c0_i32 = arith.constant 0 : i32
    %c0_i32_0 = arith.constant 0 : i32
    %c0_i32_1 = arith.constant 0 : i32
    return %c0_i32, %c0_i32_0 : i32, i32
  }
  func.func @transform_1(%arg0: i32) -> (i32, i32) {
    %c0_i32 = arith.constant 0 : i32
    %c0_i32_0 = arith.constant 0 : i32
    %c0_i32_1 = arith.constant 0 : i32
    return %c0_i32, %c0_i32_0 : i32, i32
  }
  func.func @transform_2(%arg0: i32) -> (i32, i32) {
    %c0_i32 = arith.constant 0 : i32
    %c0_i32_0 = arith.constant 0 : i32
    %c0_i32_1 = arith.constant 0 : i32
    return %c0_i32, %c0_i32_0 : i32, i32
  }
  func.func @transform_3(%arg0: i32) -> (i32, i32) {
    %c0_i32 = arith.constant 0 : i32
    %c0_i32_0 = arith.constant 0 : i32
    %c0_i32_1 = arith.constant 0 : i32
    return %c0_i32, %c0_i32_0 : i32, i32
  }
  func.func @transform_4(%arg0: i32) -> (i32, i32) {
    %c0_i32 = arith.constant 0 : i32
    %c0_i32_0 = arith.constant 0 : i32
    %c0_i32_1 = arith.constant 0 : i32
    return %c0_i32, %c0_i32_0 : i32, i32
  }
  func.func @transform_5(%arg0: i32) -> (i32, i32) {
    %c0_i32 = arith.constant 0 : i32
    %c0_i32_0 = arith.constant 0 : i32
    %c0_i32_1 = arith.constant 0 : i32
    return %c0_i32, %c0_i32_0 : i32, i32
  }
  func.func @transform_6(%arg0: i32) -> (i32, i32) {
    %c0_i32 = arith.constant 0 : i32
    %c0_i32_0 = arith.constant 0 : i32
    %c0_i32_1 = arith.constant 0 : i32
    return %c0_i32, %c0_i32_0 : i32, i32
  }
}

</mosaic_0001>

<llo_original>
// kernel: tpu_custom_call.1
$region0: #{tpu_custom_call.1}
  #allocation0 [shape = 'u32[]', space=smem, size = 0x4, offset = 0x4, fixed_abs, tag = 'smem constant byte address 0x4 - core index']
  #allocation1 [shape = 'u32[144,128]{1,0:T(1,128)}', space=vmem, size = 0x12000, scoped, tag = 'internal scratch']
  %s0 = inlined_call_operand.vmem [shape: f32[64,16], index: 0, kind: input, shape index: {}]
  %s1 = inlined_call_operand.hbm [shape: bf16[16,512], index: 1, kind: input, shape index: {}]
  %s2 = inlined_call_operand.hbm [shape: bf16[128,512], index: 2, kind: input, shape index: {}]
  %s3 = inlined_call_operand.vmem [shape: f32[1,512], index: 3, kind: input, shape index: {}]
  %s4 = inlined_call_operand.vmem [shape: bf16[128,128], index: 4, kind: input, shape index: {}]
  %s5 = inlined_call_operand.vmem [shape: f32[1,128], index: 5, kind: input, shape index: {}]
  %s6 = inlined_call_operand.hbm [shape: f32[8,128], index: 6, kind: output, shape index: {}]
  %s7 = sld [smem:[#allocation0]]
  $region42: #{tpu_custom_call.1} parent=0
    _
  %s9 = ssub.s32 1, %s7
  %s10 = scalar_select 0, %s9, %s7
  $region1: #{tpu_custom_call.1} parent=0
    #allocation2 [shape = 'u8[16384]{0}', space=vmem, size = 0x4000, scoped, tag = 'input window, operand 1, single buffered']
    #allocation3 [shape = 's32[1]{0}', space=sflag, size = 0x4, scoped, tag = 'scoped memory for tpu_custom_call.1']
    #allocation4 [shape = 's32[1]{0}', space=sflag, size = 0x4, scoped, tag = 'scoped memory for tpu_custom_call.1']
    #allocation5 [shape = 'u8[131072]{0}', space=vmem, size = 0x20000, scoped, tag = 'input window, operand 2, single buffered']
    #allocation6 [shape = 's32[1]{0}', space=sflag, size = 0x4, scoped, tag = 'scoped memory for tpu_custom_call.1']
    #allocation7 [shape = 'u8[4096]{0}', space=vmem, size = 0x1000, scoped, tag = 'output window, operand 0, single buffered']
    %11 = vsyncpa [#allocation3], 0
    %12 = vsyncpa [#allocation6], 0
    %13 = vsyncpa [#allocation4], 0
    // Predicated region
    $region2: #{tpu_custom_call.1} parent=1 // pred_check
      _
    $region3: #{tpu_custom_call.1} parent=1 // pred_check_branch
      %15 = sbr.rel (0) target = $region5
    $region4: #{tpu_custom_call.1} parent=1 // pred_region
      _
    $region5: #{tpu_custom_call.1} parent=1 // pred_fallthru
      _
    // Predicated region
    $region6: #{tpu_custom_call.1} parent=1 // pred_check
      _
    $region7: #{tpu_custom_call.1} parent=1 // pred_check_branch
      %17 = sbr.rel (0) target = $region9
    $region8: #{tpu_custom_call.1} parent=1 // pred_region
      %s19 = ssub.s32 512, 512
      %20 = vsyncadd [#allocation3], %s19
      %s21 = sshll.u32 [#allocation2], 4
      %s22 = int_to_ptr.vmem [resolvable:$true] %s21
      %27 = dma.hbm_to_vmem [thread:$0]  %s1, 512, %s22, [#allocation3], 256, 256, 16
    $region9: #{tpu_custom_call.1} parent=1 // pred_fallthru
      _
    // Predicated region
    $region10: #{tpu_custom_call.1} parent=1 // pred_check
      _
    $region11: #{tpu_custom_call.1} parent=1 // pred_check_branch
      %29 = sbr.rel (0) target = $region13
    $region12: #{tpu_custom_call.1} parent=1 // pred_region
      %s31 = ssub.s32 4096, 4096
      %32 = vsyncadd [#allocation6], %s31
      %s33 = sshll.u32 [#allocation5], 4
      %s34 = int_to_ptr.vmem [resolvable:$true] %s33
      %39 = dma.hbm_to_vmem [thread:$0]  %s2, 4096, %s34, [#allocation6], 256, 256, 16
    $region13: #{tpu_custom_call.1} parent=1 // pred_fallthru
      _
    // Predicated region
    $region14: #{tpu_custom_call.1} parent=1 // pred_check
      _
    $region15: #{tpu_custom_call.1} parent=1 // pred_check_branch
      %41 = sbr.rel (0) target = $region17
    $region16: #{tpu_custom_call.1} parent=1 // pred_region
      _
    $region17: #{tpu_custom_call.1} parent=1 // pred_fallthru
      _
    // Predicated region
    $region18: #{tpu_custom_call.1} parent=1 // pred_check
      _
    $region19: #{tpu_custom_call.1} parent=1 // pred_check_branch
      %43 = sbr.rel (0) target = $region21
    $region20: #{tpu_custom_call.1} parent=1 // pred_region
      _
    $region21: #{tpu_custom_call.1} parent=1 // pred_fallthru
      _
    // Predicated region
    $region22: #{tpu_custom_call.1} parent=1 // pred_check
      _
    $region23: #{tpu_custom_call.1} parent=1 // pred_check_branch
      %45 = sbr.rel (0) target = $region25
    $region24: #{tpu_custom_call.1} parent=1 // pred_region
      _
    $region25: #{tpu_custom_call.1} parent=1 // pred_fallthru
      _
    // Predicated region
    $region26: #{tpu_custom_call.1} parent=1 // pred_check
      _
    $region27: #{tpu_custom_call.1} parent=1 // pred_check_branch
      %47 = sbr.rel (0) target = $region29
    $region28: #{tpu_custom_call.1} parent=1 // pred_region
      %48 = dma.done [#allocation3], 512
    $region29: #{tpu_custom_call.1} parent=1 // pred_fallthru
      _
    // Predicated region
    $region30: #{tpu_custom_call.1} parent=1 // pred_check
      _
    $region31: #{tpu_custom_call.1} parent=1 // pred_check_branch
      %50 = sbr.rel (0) target = $region33
    $region32: #{tpu_custom_call.1} parent=1 // pred_region
      %51 = dma.done [#allocation6], 4096
    $region33: #{tpu_custom_call.1} parent=1 // pred_fallthru
      _
    %v53 = vld [vmem:[%s0] sm:$0xff]
    %v54 = vld [vmem:[%s0 + $0x8] sm:$0xff]
    %v55 = vld [vmem:[%s0 + $0x10] sm:$0xff]
    %v56 = vld [vmem:[%s0 + $0x18] sm:$0xff]
    %v57 = vld [vmem:[%s0 + $0x20] sm:$0xff]
    %v58 = vld [vmem:[%s0 + $0x28] sm:$0xff]
    %v59 = vld [vmem:[%s0 + $0x30] sm:$0xff]
    %v60 = vld [vmem:[%s0 + $0x38] sm:$0xff]
    %v61 = vpack.c.bf16 %v54, %v53
    %v62 = vpack.c.bf16 %v56, %v55
    %v63 = vpack.c.bf16 %v58, %v57
    %v64 = vpack.c.bf16 %v60, %v59
    %v65 = vld [vmem:[#allocation2] sm:$0xff]
    %v66 = vld [vmem:[#allocation2 + $0x8] sm:$0xff]
    %v67 = vld [vmem:[#allocation2 + $0x10] sm:$0xff]
    %v68 = vld [vmem:[#allocation2 + $0x18] sm:$0xff]
    %v69 = vld [vmem:[%s3] sm:$0xf]
    %v71 = vlaneseq
    %v72 = vshrl.u32 %v71, 7
    %v73 = vsub.s32 0, %v72
    %v74 = vrot.slane %v69, %v73
    %v75 = vlaneseq
    %v76 = vshrl.u32 %v75, 7
    %v77 = vsub.s32 1, %v76
    %v78 = vrot.slane %v69, %v77
    %v79 = vlaneseq
    %v80 = vshrl.u32 %v79, 7
    %v81 = vsub.s32 2, %v80
    %v82 = vrot.slane %v69, %v81
    %v83 = vlaneseq
    %v84 = vshrl.u32 %v83, 7
    %v85 = vsub.s32 3, %v84
    %v86 = vrot.slane %v69, %v85
    %v95 = vunpack.c.l.b16 %v65
    %v96 = vunpack.c.h.b16 %v65
    %v97 = vunpack.c.l.b16 %v66
    %v98 = vunpack.c.h.b16 %v66
    %v99 = vunpack.c.l.b16 %v67
    %v100 = vunpack.c.h.b16 %v67
    %v101 = vunpack.c.l.b16 %v68
    %v102 = vunpack.c.h.b16 %v68
    %v103 = vpack.c.b16 %v99, %v95
    %v104 = vpack.c.b16 %v100, %v96
    %v105 = vpack.c.b16 %v101, %v97
    %v106 = vpack.c.b16 %v102, %v98
    %vm111 = vcmask 130048
    %v113 = vsel %vm111, %v61, 0
    %v116 = vsel %vm111, %v62, 0
    %v119 = vsel %vm111, %v63, 0
    %v122 = vsel %vm111, %v64, 0
    %124 = vmatprep.subr.bf16.mxu0 0
    %125 = vmatpush1.bf16.msra.mxu0 0
    %126 = vmatprep.subr.bf16.mxu0 0
    %127 = vmatpush1.bf16.msra.mxu0 0
    %128 = vmatprep.subr.bf16.mxu0 0
    %129 = vmatpush1.bf16.msra.mxu0 0
    %130 = vmatprep.subr.bf16.mxu0 0
    %131 = vmatpush1.bf16.msra.mxu0 0
    %132 = vmatprep.subr.bf16.mxu0 0
    %133 = vmatpush1.bf16.msra.mxu0 0
    %134 = vmatprep.subr.bf16.mxu0 0
    %135 = vmatpush1.bf16.msra.mxu0 0
    %136 = vmatprep.subr.bf16.mxu0 0
    %137 = vmatpush1.bf16.msra.mxu0 0
    %138 = vmatprep.subr.bf16.mxu0 %v104
    %139 = vmatpush1.bf16.msra.mxu0 %v103
    %140 = vmatprep.subr.bf16.mxu0 0
    %141 = vmatpush2.bf16.msra.mxu0 0
    %142 = vmatprep.subr.bf16.mxu0 0
    %143 = vmatpush2.bf16.msra.mxu0 0
    %144 = vmatprep.subr.bf16.mxu0 0
    %145 = vmatpush2.bf16.msra.mxu0 0
    %146 = vmatprep.subr.bf16.mxu0 0
    %147 = vmatpush2.bf16.msra.mxu0 0
    %148 = vmatprep.subr.bf16.mxu0 0
    %149 = vmatpush2.bf16.msra.mxu0 0
    %150 = vmatprep.subr.bf16.mxu0 0
    %151 = vmatpush2.bf16.msra.mxu0 0
    %152 = vmatprep.subr.bf16.mxu0 0
    %153 = vmatpush2.bf16.msra.mxu0 0
    %154 = vmatprep.subr.bf16.mxu0 0
    %155 = vmatpush2.bf16.msra.mxu0 0
    %156 = vmatprep.mubr.bf16.mxu0 0
    %157 = vmatmul.mubr.bf16.gmra.mxu0 %v113
    %v158 = vpop.f32.mrf.mxu0
    %v159 = vadd.f32 %v74, %v158
    %v160 = vpop.f32.mrf.mxu0
    %v161 = vadd.f32 %v78, %v160
    %v162 = vpop.f32.mrf.mxu0
    %v163 = vadd.f32 %v74, %v162
    %v164 = vpop.f32.mrf.mxu0
    %v165 = vadd.f32 %v78, %v164
    %166 = vmatprep.mubr.bf16.mxu0 0
    %167 = vmatmul.mubr.bf16.gmra.mxu0 %v116
    %v168 = vpop.f32.mrf.mxu0
    %v169 = vadd.f32 %v74, %v168
    %v170 = vpop.f32.mrf.mxu0
    %v171 = vadd.f32 %v78, %v170
    %v172 = vpop.f32.mrf.mxu0
    %v173 = vadd.f32 %v74, %v172
    %v174 = vpop.f32.mrf.mxu0
    %v175 = vadd.f32 %v78, %v174
    %176 = vmatprep.mubr.bf16.mxu0 0
    %177 = vmatmul.mubr.bf16.gmra.mxu0 %v119
    %v178 = vpop.f32.mrf.mxu0
    %v179 = vadd.f32 %v74, %v178
    %v180 = vpop.f32.mrf.mxu0
    %v181 = vadd.f32 %v78, %v180
    %v182 = vpop.f32.mrf.mxu0
    %v183 = vadd.f32 %v74, %v182
    %v184 = vpop.f32.mrf.mxu0
    %v185 = vadd.f32 %v78, %v184
    %186 = vmatprep.mubr.bf16.mxu0 0
    %187 = vmatmul.mubr.bf16.gmra.mxu0 %v122
    %v188 = vpop.f32.mrf.mxu0
    %v189 = vadd.f32 %v74, %v188
    %v190 = vpop.f32.mrf.mxu0
    %v191 = vadd.f32 %v78, %v190
    %v192 = vpop.f32.mrf.mxu0
    %v193 = vadd.f32 %v74, %v192
    %v194 = vpop.f32.mrf.mxu0
    %v195 = vadd.f32 %v78, %v194
    %196 = vdwg.mxu0
    %197 = vmatprep.subr.bf16.mxu0 0
    %198 = vmatpush1.bf16.msra.mxu0 0
    %199 = vmatprep.subr.bf16.mxu0 0
    %200 = vmatpush1.bf16.msra.mxu0 0
    %201 = vmatprep.subr.bf16.mxu0 0
    %202 = vmatpush1.bf16.msra.mxu0 0
    %203 = vmatprep.subr.bf16.mxu0 0
    %204 = vmatpush1.bf16.msra.mxu0 0
    %205 = vmatprep.subr.bf16.mxu0 0
    %206 = vmatpush1.bf16.msra.mxu0 0
    %207 = vmatprep.subr.bf16.mxu0 0
    %208 = vmatpush1.bf16.msra.mxu0 0
    %209 = vmatprep.subr.bf16.mxu0 0
    %210 = vmatpush1.bf16.msra.mxu0 0
    %211 = vmatprep.subr.bf16.mxu0 %v106
    %212 = vmatpush1.bf16.msra.mxu0 %v105
    %213 = vmatprep.subr.bf16.mxu0 0
    %214 = vmatpush2.bf16.msra.mxu0 0
    %215 = vmatprep.subr.bf16.mxu0 0
    %216 = vmatpush2.bf16.msra.mxu0 0
    %217 = vmatprep.subr.bf16.mxu0 0
    %218 = vmatpush2.bf16.msra.mxu0 0
    %219 = vmatprep.subr.bf16.mxu0 0
    %220 = vmatpush2.bf16.msra.mxu0 0
    %221 = vmatprep.subr.bf16.mxu0 0
    %222 = vmatpush2.bf16.msra.mxu0 0
    %223 = vmatprep.subr.bf16.mxu0 0
    %224 = vmatpush2.bf16.msra.mxu0 0
    %225 = vmatprep.subr.bf16.mxu0 0
    %226 = vmatpush2.bf16.msra.mxu0 0
    %227 = vmatprep.subr.bf16.mxu0 0
    %228 = vmatpush2.bf16.msra.mxu0 0
    %229 = vmatprep.mubr.bf16.mxu0 0
    %230 = vmatmul.mubr.bf16.gmra.mxu0 %v113
    %v231 = vpop.f32.mrf.mxu0
    %v232 = vadd.f32 %v82, %v231
    %v233 = vpop.f32.mrf.mxu0
    %v234 = vadd.f32 %v86, %v233
    %v235 = vpop.f32.mrf.mxu0
    %v236 = vadd.f32 %v82, %v235
    %v237 = vpop.f32.mrf.mxu0
    %v238 = vadd.f32 %v86, %v237
    %239 = vmatprep.mubr.bf16.mxu0 0
    %240 = vmatmul.mubr.bf16.gmra.mxu0 %v116
    %v241 = vpop.f32.mrf.mxu0
    %v242 = vadd.f32 %v82, %v241
    %v243 = vpop.f32.mrf.mxu0
    %v244 = vadd.f32 %v86, %v243
    %v245 = vpop.f32.mrf.mxu0
    %v246 = vadd.f32 %v82, %v245
    %v247 = vpop.f32.mrf.mxu0
    %v248 = vadd.f32 %v86, %v247
    %249 = vmatprep.mubr.bf16.mxu0 0
    %250 = vmatmul.mubr.bf16.gmra.mxu0 %v119
    %v251 = vpop.f32.mrf.mxu0
    %v252 = vadd.f32 %v82, %v251
    %v253 = vpop.f32.mrf.mxu0
    %v254 = vadd.f32 %v86, %v253
    %v255 = vpop.f32.mrf.mxu0
    %v256 = vadd.f32 %v82, %v255
    %v257 = vpop.f32.mrf.mxu0
    %v258 = vadd.f32 %v86, %v257
    %259 = vmatprep.mubr.bf16.mxu0 0
    %260 = vmatmul.mubr.bf16.gmra.mxu0 %v122
    %v261 = vpop.f32.mrf.mxu0
    %v262 = vadd.f32 %v82, %v261
    %v263 = vpop.f32.mrf.mxu0
    %v264 = vadd.f32 %v86, %v263
    %v265 = vpop.f32.mrf.mxu0
    %v266 = vadd.f32 %v82, %v265
    %v267 = vpop.f32.mrf.mxu0
    %v268 = vadd.f32 %v86, %v267
    %269 = vdwg.mxu0
    %v270 = vld [vmem:[#allocation5] sm:$0xff]
    %v271 = vld [vmem:[#allocation5 + $0x8] sm:$0xff]
    %v272 = vld [vmem:[#allocation5 + $0x10] sm:$0xff]
    %v273 = vld [vmem:[#allocation5 + $0x18] sm:$0xff]
    %v274 = vld [vmem:[#allocation5 + $0x20] sm:$0xff]
    %v275 = vld [vmem:[#allocation5 + $0x28] sm:$0xff]
    %v276 = vld [vmem:[#allocation5 + $0x30] sm:$0xff]
    %v277 = vld [vmem:[#allocation5 + $0x38] sm:$0xff]
    %v278 = vld [vmem:[#allocation5 + $0x40] sm:$0xff]
    %v279 = vld [vmem:[#allocation5 + $0x48] sm:$0xff]
    %v280 = vld [vmem:[#allocation5 + $0x50] sm:$0xff]
    %v281 = vld [vmem:[#allocation5 + $0x58] sm:$0xff]
    %v282 = vld [vmem:[#allocation5 + $0x60] sm:$0xff]
    %v283 = vld [vmem:[#allocation5 + $0x68] sm:$0xff]
    %v284 = vld [vmem:[#allocation5 + $0x70] sm:$0xff]
    %v285 = vld [vmem:[#allocation5 + $0x78] sm:$0xff]
    %v286 = vld [vmem:[#allocation5 + $0x80] sm:$0xff]
    %v287 = vld [vmem:[#allocation5 + $0x88] sm:$0xff]
    %v288 = vld [vmem:[#allocation5 + $0x90] sm:$0xff]
    %v289 = vld [vmem:[#allocation5 + $0x98] sm:$0xff]
    %v290 = vld [vmem:[#allocation5 + $0xa0] sm:$0xff]
    %v291 = vld [vmem:[#allocation5 + $0xa8] sm:$0xff]
    %v292 = vld [vmem:[#allocation5 + $0xb0] sm:$0xff]
    %v293 = vld [vmem:[#allocation5 + $0xb8] sm:$0xff]
    %v294 = vld [vmem:[#allocation5 + $0xc0] sm:$0xff]
    %v295 = vld [vmem:[#allocation5 + $0xc8] sm:$0xff]
    %v296 = vld [vmem:[#allocation5 + $0xd0] sm:$0xff]
    %v297 = vld [vmem:[#allocation5 + $0xd8] sm:$0xff]
    %v298 = vld [vmem:[#allocation5 + $0xe0] sm:$0xff]
    %v299 = vld [vmem:[#allocation5 + $0xe8] sm:$0xff]
    %v300 = vld [vmem:[#allocation5 + $0xf0] sm:$0xff]
    %v301 = vld [vmem:[#allocation5 + $0xf8] sm:$0xff]
    %v334 = vunpack.c.l.b16 %v270
    %v335 = vunpack.c.h.b16 %v270
    %v336 = vunpack.c.l.b16 %v271
    %v337 = vunpack.c.h.b16 %v271
    %v338 = vunpack.c.l.b16 %v272
    %v339 = vunpack.c.h.b16 %v272
    %v340 = vunpack.c.l.b16 %v273
    %v341 = vunpack.c.h.b16 %v273
    %v342 = vunpack.c.l.b16 %v274
    %v343 = vunpack.c.h.b16 %v274
    %v344 = vunpack.c.l.b16 %v275
    %v345 = vunpack.c.h.b16 %v275
    %v346 = vunpack.c.l.b16 %v276
    %v347 = vunpack.c.h.b16 %v276
    %v348 = vunpack.c.l.b16 %v277
    %v349 = vunpack.c.h.b16 %v277
    %v350 = vunpack.c.l.b16 %v278
    %v351 = vunpack.c.h.b16 %v278
    %v352 = vunpack.c.l.b16 %v279
    %v353 = vunpack.c.h.b16 %v279
    %v354 = vunpack.c.l.b16 %v280
    %v355 = vunpack.c.h.b16 %v280
    %v356 = vunpack.c.l.b16 %v281
    %v357 = vunpack.c.h.b16 %v281
    %v358 = vunpack.c.l.b16 %v282
    %v359 = vunpack.c.h.b16 %v282
    %v360 = vunpack.c.l.b16 %v283
    %v361 = vunpack.c.h.b16 %v283
    %v362 = vunpack.c.l.b16 %v284
    %v363 = vunpack.c.h.b16 %v284
    %v364 = vunpack.c.l.b16 %v285
    %v365 = vunpack.c.h.b16 %v285
    %v366 = vunpack.c.l.b16 %v286
    %v367 = vunpack.c.h.b16 %v286
    %v368 = vunpack.c.l.b16 %v287
    %v369 = vunpack.c.h.b16 %v287
    %v370 = vunpack.c.l.b16 %v288
    %v371 = vunpack.c.h.b16 %v288
    %v372 = vunpack.c.l.b16 %v289
    %v373 = vunpack.c.h.b16 %v289
    %v374 = vunpack.c.l.b16 %v290
    %v375 = vunpack.c.h.b16 %v290
    %v376 = vunpack.c.l.b16 %v291
    %v377 = vunpack.c.h.b16 %v291
    %v378 = vunpack.c.l.b16 %v292
    %v379 = vunpack.c.h.b16 %v292
    %v380 = vunpack.c.l.b16 %v293
    %v381 = vunpack.c.h.b16 %v293
    %v382 = vunpack.c.l.b16 %v294
    %v383 = vunpack.c.h.b16 %v294
    %v384 = vunpack.c.l.b16 %v295
    %v385 = vunpack.c.h.b16 %v295
    %v386 = vunpack.c.l.b16 %v296
    %v387 = vunpack.c.h.b16 %v296
    %v388 = vunpack.c.l.b16 %v297
    %v389 = vunpack.c.h.b16 %v297
    %v390 = vunpack.c.l.b16 %v298
    %v391 = vunpack.c.h.b16 %v298
    %v392 = vunpack.c.l.b16 %v299
    %v393 = vunpack.c.h.b16 %v299
    %v394 = vunpack.c.l.b16 %v300
    %v395 = vunpack.c.h.b16 %v300
    %v396 = vunpack.c.l.b16 %v301
    %v397 = vunpack.c.h.b16 %v301
    %v398 = vpack.c.b16 %v338, %v334
    %v399 = vpack.c.b16 %v339, %v335
    %v400 = vpack.c.b16 %v340, %v336
    %v401 = vpack.c.b16 %v341, %v337
    %v402 = vpack.c.b16 %v346, %v342
    %v403 = vpack.c.b16 %v347, %v343
    %v404 = vpack.c.b16 %v348, %v344
    %v405 = vpack.c.b16 %v349, %v345
    %v406 = vpack.c.b16 %v354, %v350
    %v407 = vpack.c.b16 %v355, %v351
    %v408 = vpack.c.b16 %v356, %v352
    %v409 = vpack.c.b16 %v357, %v353
    %v410 = vpack.c.b16 %v362, %v358
    %v411 = vpack.c.b16 %v363, %v359
    %v412 = vpack.c.b16 %v364, %v360
    %v413 = vpack.c.b16 %v365, %v361
    %v414 = vpack.c.b16 %v370, %v366
    %v415 = vpack.c.b16 %v371, %v367
    %v416 = vpack.c.b16 %v372, %v368
    %v417 = vpack.c.b16 %v373, %v369
    %v418 = vpack.c.b16 %v378, %v374
    %v419 = vpack.c.b16 %v379, %v375
    %v420 = vpack.c.b16 %v380, %v376
    %v421 = vpack.c.b16 %v381, %v377
    %v422 = vpack.c.b16 %v386, %v382
    %v423 = vpack.c.b16 %v387, %v383
    %v424 = vpack.c.b16 %v388, %v384
    %v425 = vpack.c.b16 %v389, %v385
    %v426 = vpack.c.b16 %v394, %v390
    %v427 = vpack.c.b16 %v395, %v391
    %v428 = vpack.c.b16 %v396, %v392
    %v429 = vpack.c.b16 %v397, %v393
    %462 = vmatprep.subr.bf16.mxu0 %v427
    %463 = vmatpush1.bf16.msra.mxu0 %v426
    %464 = vmatprep.subr.bf16.mxu0 %v423
    %465 = vmatpush1.bf16.msra.mxu0 %v422
    %466 = vmatprep.subr.bf16.mxu0 %v419
    %467 = vmatpush1.bf16.msra.mxu0 %v418
    %468 = vmatprep.subr.bf16.mxu0 %v415
    %469 = vmatpush1.bf16.msra.mxu0 %v414
    %470 = vmatprep.subr.bf16.mxu0 %v411
    %471 = vmatpush1.bf16.msra.mxu0 %v410
    %472 = vmatprep.subr.bf16.mxu0 %v407
    %473 = vmatpush1.bf16.msra.mxu0 %v406
    %474 = vmatprep.subr.bf16.mxu0 %v403
    %475 = vmatpush1.bf16.msra.mxu0 %v402
    %476 = vmatprep.subr.bf16.mxu0 %v399
    %477 = vmatpush1.bf16.msra.mxu0 %v398
    %478 = vmatprep.subr.bf16.mxu0 0
    %479 = vmatpush2.bf16.msra.mxu0 0
    %480 = vmatprep.subr.bf16.mxu0 0
    %481 = vmatpush2.bf16.msra.mxu0 0
    %482 = vmatprep.subr.bf16.mxu0 0
    %483 = vmatpush2.bf16.msra.mxu0 0
    %484 = vmatprep.subr.bf16.mxu0 0
    %485 = vmatpush2.bf16.msra.mxu0 0
    %486 = vmatprep.subr.bf16.mxu0 0
    %487 = vmatpush2.bf16.msra.mxu0 0
    %488 = vmatprep.subr.bf16.mxu0 0
    %489 = vmatpush2.bf16.msra.mxu0 0
    %490 = vmatprep.subr.bf16.mxu0 0
    %491 = vmatpush2.bf16.msra.mxu0 0
    %492 = vmatprep.subr.bf16.mxu0 0
    %493 = vmatpush2.bf16.msra.mxu0 0
    %494 = vmatprep.mubr.bf16.mxu0 0
    %495 = vmatmul.mubr.bf16.gmra.mxu0 0
    %v496 = vpop.f32.mrf.mxu0
    %v497 = vadd.f32 0.0, %v496
    %v498 = vpop.f32.mrf.mxu0
    %v499 = vadd.f32 0.0, %v498
    %v500 = vpop.f32.mrf.mxu0
    %v501 = vpop.f32.mrf.mxu0
    %502 = vdwg.mxu0
    %503 = vmatprep.subr.bf16.mxu0 %v429
    %504 = vmatpush1.bf16.msra.mxu0 %v428
    %505 = vmatprep.subr.bf16.mxu0 %v425
    %506 = vmatpush1.bf16.msra.mxu0 %v424
    %507 = vmatprep.subr.bf16.mxu0 %v421
    %508 = vmatpush1.bf16.msra.mxu0 %v420
    %509 = vmatprep.subr.bf16.mxu0 %v417
    %510 = vmatpush1.bf16.msra.mxu0 %v416
    %511 = vmatprep.subr.bf16.mxu0 %v413
    %512 = vmatpush1.bf16.msra.mxu0 %v412
    %513 = vmatprep.subr.bf16.mxu0 %v409
    %514 = vmatpush1.bf16.msra.mxu0 %v408
    %515 = vmatprep.subr.bf16.mxu0 %v405
    %516 = vmatpush1.bf16.msra.mxu0 %v404
    %517 = vmatprep.subr.bf16.mxu0 %v401
    %518 = vmatpush1.bf16.msra.mxu0 %v400
    %519 = vmatprep.subr.bf16.mxu0 0
    %520 = vmatpush2.bf16.msra.mxu0 0
    %521 = vmatprep.subr.bf16.mxu0 0
    %522 = vmatpush2.bf16.msra.mxu0 0
    %523 = vmatprep.subr.bf16.mxu0 0
    %524 = vmatpush2.bf16.msra.mxu0 0
    %525 = vmatprep.subr.bf16.mxu0 0
    %526 = vmatpush2.bf16.msra.mxu0 0
    %527 = vmatprep.subr.bf16.mxu0 0
    %528 = vmatpush2.bf16.msra.mxu0 0
    %529 = vmatprep.subr.bf16.mxu0 0
    %530 = vmatpush2.bf16.msra.mxu0 0
    %531 = vmatprep.subr.bf16.mxu0 0
    %532 = vmatpush2.bf16.msra.mxu0 0
    %533 = vmatprep.subr.bf16.mxu0 0
    %534 = vmatpush2.bf16.msra.mxu0 0
    %535 = vmatprep.mubr.bf16.mxu0 0
    %536 = vmatmul.mubr.bf16.gmra.mxu0 0
    %v537 = vpop.f32.mrf.mxu0
    %v538 = vadd.f32 0.0, %v537
    %v539 = vpop.f32.mrf.mxu0
    %v540 = vadd.f32 0.0, %v539
    %v541 = vpop.f32.mrf.mxu0
    %v542 = vpop.f32.mrf.mxu0
    %543 = vdwg.mxu0
    %v544 = vadd.f32 %v159, %v497
    %v545 = vadd.f32 %v161, %v499
    %v546 = vadd.f32 %v232, %v538
    %v547 = vadd.f32 %v234, %v540
    %v548 = vxor.u32 %v544, 2147483648
    %v549 = vxor.u32 %v545, 2147483648
    %v550 = vxor.u32 %v546, 2147483648
    %v551 = vmul.f32 %v548, 1.442695
    %v552 = vpow.pop %v551
    %v553 = vmul.f32 %v549, 1.442695
    %v554 = vpow.pop %v553
    %v555 = vmul.f32 %v550, 1.442695
    %v556 = vpow.pop %v555
    %v557 = vadd.f32 %v552, 1.0
    %v558 = vadd.f32 %v554, 1.0
    %v559 = vadd.f32 %v556, 1.0
    %v560 = vrcp.pop %v557
    %v561 = vmul.f32 1.0, %v560
    %v562 = vrcp.pop %v558
    %v563 = vmul.f32 1.0, %v562
    %v564 = vrcp.pop %v559
    %v565 = vmul.f32 1.0, %v564
    %v566 = vtanh.pop %v547
    %v567 = vmul.f32 %v563, 0.0
    %v568 = vmul.f32 %v561, %v566
    %v569 = vadd.f32 %v567, %v568
    %v570 = vtanh.pop %v569
    %v571 = vmul.f32 %v565, %v570
    %v572 = vpack.c.bf16 %v571, %v571
    %573 = vmatprep.subr.bf16.mxu0 %v427
    %574 = vmatpush1.bf16.msra.mxu0 %v426
    %575 = vmatprep.subr.bf16.mxu0 %v423
    %576 = vmatpush1.bf16.msra.mxu0 %v422
    %577 = vmatprep.subr.bf16.mxu0 %v419
    %578 = vmatpush1.bf16.msra.mxu0 %v418
    %579 = vmatprep.subr.bf16.mxu0 %v415
    %580 = vmatpush1.bf16.msra.mxu0 %v414
    %581 = vmatprep.subr.bf16.mxu0 %v411
    %582 = vmatpush1.bf16.msra.mxu0 %v410
    %583 = vmatprep.subr.bf16.mxu0 %v407
    %584 = vmatpush1.bf16.msra.mxu0 %v406
    %585 = vmatprep.subr.bf16.mxu0 %v403
    %586 = vmatpush1.bf16.msra.mxu0 %v402
    %587 = vmatprep.subr.bf16.mxu0 %v399
    %588 = vmatpush1.bf16.msra.mxu0 %v398
    %589 = vmatprep.subr.bf16.mxu0 0
    %590 = vmatpush2.bf16.msra.mxu0 0
    %591 = vmatprep.subr.bf16.mxu0 0
    %592 = vmatpush2.bf16.msra.mxu0 0
    %593 = vmatprep.subr.bf16.mxu0 0
    %594 = vmatpush2.bf16.msra.mxu0 0
    %595 = vmatprep.subr.bf16.mxu0 0
    %596 = vmatpush2.bf16.msra.mxu0 0
    %597 = vmatprep.subr.bf16.mxu0 0
    %598 = vmatpush2.bf16.msra.mxu0 0
    %599 = vmatprep.subr.bf16.mxu0 0
    %600 = vmatpush2.bf16.msra.mxu0 0
    %601 = vmatprep.subr.bf16.mxu0 0
    %602 = vmatpush2.bf16.msra.mxu0 0
    %603 = vmatprep.subr.bf16.mxu0 0
    %604 = vmatpush2.bf16.msra.mxu0 0
    %605 = vmatprep.mubr.bf16.mxu0 0
    %606 = vmatmul.mubr.bf16.gmra.mxu0 %v572
    %v607 = vpop.f32.mrf.mxu0
    %v608 = vadd.f32 0.0, %v607
    %v609 = vpop.f32.mrf.mxu0
    %v610 = vadd.f32 0.0, %v609
    %v611 = vpop.f32.mrf.mxu0
    %v612 = vpop.f32.mrf.mxu0
    %613 = vdwg.mxu0
    %614 = vmatprep.subr.bf16.mxu0 %v429
    %615 = vmatpush1.bf16.msra.mxu0 %v428
    %616 = vmatprep.subr.bf16.mxu0 %v425
    %617 = vmatpush1.bf16.msra.mxu0 %v424
    %618 = vmatprep.subr.bf16.mxu0 %v421
    %619 = vmatpush1.bf16.msra.mxu0 %v420
    %620 = vmatprep.subr.bf16.mxu0 %v417
    %621 = vmatpush1.bf16.msra.mxu0 %v416
    %622 = vmatprep.subr.bf16.mxu0 %v413
    %623 = vmatpush1.bf16.msra.mxu0 %v412
    %624 = vmatprep.subr.bf16.mxu0 %v409
    %625 = vmatpush1.bf16.msra.mxu0 %v408
    %626 = vmatprep.subr.bf16.mxu0 %v405
    %627 = vmatpush1.bf16.msra.mxu0 %v404
    %628 = vmatprep.subr.bf16.mxu0 %v401
    %629 = vmatpush1.bf16.msra.mxu0 %v400
    %630 = vmatprep.subr.bf16.mxu0 0
    %631 = vmatpush2.bf16.msra.mxu0 0
    %632 = vmatprep.subr.bf16.mxu0 0
    %633 = vmatpush2.bf16.msra.mxu0 0
    %634 = vmatprep.subr.bf16.mxu0 0
    %635 = vmatpush2.bf16.msra.mxu0 0
    %636 = vmatprep.subr.bf16.mxu0 0
    %637 = vmatpush2.bf16.msra.mxu0 0
    %638 = vmatprep.subr.bf16.mxu0 0
    %639 = vmatpush2.bf16.msra.mxu0 0
    %640 = vmatprep.subr.bf16.mxu0 0
    %641 = vmatpush2.bf16.msra.mxu0 0
    %642 = vmatprep.subr.bf16.mxu0 0
    %643 = vmatpush2.bf16.msra.mxu0 0
    %644 = vmatprep.subr.bf16.mxu0 0
    %645 = vmatpush2.bf16.msra.mxu0 0
    %646 = vmatprep.mubr.bf16.mxu0 0
    %647 = vmatmul.mubr.bf16.gmra.mxu0 %v572
    %v648 = vpop.f32.mrf.mxu0
    %v649 = vadd.f32 0.0, %v648
    %v650 = vpop.f32.mrf.mxu0
    %v651 = vadd.f32 0.0, %v650
    %v652 = vpop.f32.mrf.mxu0
    %v653 = vpop.f32.mrf.mxu0
    %654 = vdwg.mxu0
    %v655 = vadd.f32 %v163, %v608
    %v656 = vadd.f32 %v165, %v610
    %v657 = vadd.f32 %v236, %v649
    %v658 = vadd.f32 %v238, %v651
    %v659 = vxor.u32 %v655, 2147483648
    %v660 = vxor.u32 %v656, 2147483648
    %v661 = vxor.u32 %v657, 2147483648
    %v662 = vmul.f32 %v659, 1.442695
    %v663 = vpow.pop %v662
    %v664 = vmul.f32 %v660, 1.442695
    %v665 = vpow.pop %v664
    %v666 = vmul.f32 %v661, 1.442695
    %v667 = vpow.pop %v666
    %v668 = vadd.f32 %v663, 1.0
    %v669 = vadd.f32 %v665, 1.0
    %v670 = vadd.f32 %v667, 1.0
    %v671 = vrcp.pop %v668
    %v672 = vmul.f32 1.0, %v671
    %v673 = vrcp.pop %v669
    %v674 = vmul.f32 1.0, %v673
    %v675 = vrcp.pop %v670
    %v676 = vmul.f32 1.0, %v675
    %v677 = vtanh.pop %v658
    %v678 = vmul.f32 %v674, %v569
    %v679 = vmul.f32 %v672, %v677
    %v680 = vadd.f32 %v678, %v679
    %v681 = vtanh.pop %v680
    %v682 = vmul.f32 %v676, %v681
    %v683 = vpack.c.bf16 %v682, %v682
    %684 = vmatprep.subr.bf16.mxu0 %v427
    %685 = vmatpush1.bf16.msra.mxu0 %v426
    %686 = vmatprep.subr.bf16.mxu0 %v423
    %687 = vmatpush1.bf16.msra.mxu0 %v422
    %688 = vmatprep.subr.bf16.mxu0 %v419
    %689 = vmatpush1.bf16.msra.mxu0 %v418
    %690 = vmatprep.subr.bf16.mxu0 %v415
    %691 = vmatpush1.bf16.msra.mxu0 %v414
    %692 = vmatprep.subr.bf16.mxu0 %v411
    %693 = vmatpush1.bf16.msra.mxu0 %v410
    %694 = vmatprep.subr.bf16.mxu0 %v407
    %695 = vmatpush1.bf16.msra.mxu0 %v406
    %696 = vmatprep.subr.bf16.mxu0 %v403
    %697 = vmatpush1.bf16.msra.mxu0 %v402
    %698 = vmatprep.subr.bf16.mxu0 %v399
    %699 = vmatpush1.bf16.msra.mxu0 %v398
    %700 = vmatprep.subr.bf16.mxu0 0
    %701 = vmatpush2.bf16.msra.mxu0 0
    %702 = vmatprep.subr.bf16.mxu0 0
    %703 = vmatpush2.bf16.msra.mxu0 0
    %704 = vmatprep.subr.bf16.mxu0 0
    %705 = vmatpush2.bf16.msra.mxu0 0
    %706 = vmatprep.subr.bf16.mxu0 0
    %707 = vmatpush2.bf16.msra.mxu0 0
    %708 = vmatprep.subr.bf16.mxu0 0
    %709 = vmatpush2.bf16.msra.mxu0 0
    %710 = vmatprep.subr.bf16.mxu0 0
    %711 = vmatpush2.bf16.msra.mxu0 0
    %712 = vmatprep.subr.bf16.mxu0 0
    %713 = vmatpush2.bf16.msra.mxu0 0
    %714 = vmatprep.subr.bf16.mxu0 0
    %715 = vmatpush2.bf16.msra.mxu0 0
    %716 = vmatprep.mubr.bf16.mxu0 0
    %717 = vmatmul.mubr.bf16.gmra.mxu0 %v683
    %v718 = vpop.f32.mrf.mxu0
    %v719 = vadd.f32 0.0, %v718
    %v720 = vpop.f32.mrf.mxu0
    %v721 = vadd.f32 0.0, %v720
    %v722 = vpop.f32.mrf.mxu0
    %v723 = vpop.f32.mrf.mxu0
    %724 = vdwg.mxu0
    %725 = vmatprep.subr.bf16.mxu0 %v429
    %726 = vmatpush1.bf16.msra.mxu0 %v428
    %727 = vmatprep.subr.bf16.mxu0 %v425
    %728 = vmatpush1.bf16.msra.mxu0 %v424
    %729 = vmatprep.subr.bf16.mxu0 %v421
    %730 = vmatpush1.bf16.msra.mxu0 %v420
    %731 = vmatprep.subr.bf16.mxu0 %v417
    %732 = vmatpush1.bf16.msra.mxu0 %v416
    %733 = vmatprep.subr.bf16.mxu0 %v413
    %734 = vmatpush1.bf16.msra.mxu0 %v412
    %735 = vmatprep.subr.bf16.mxu0 %v409
    %736 = vmatpush1.bf16.msra.mxu0 %v408
    %737 = vmatprep.subr.bf16.mxu0 %v405
    %738 = vmatpush1.bf16.msra.mxu0 %v404
    %739 = vmatprep.subr.bf16.mxu0 %v401
    %740 = vmatpush1.bf16.msra.mxu0 %v400
    %741 = vmatprep.subr.bf16.mxu0 0
    %742 = vmatpush2.bf16.msra.mxu0 0
    %743 = vmatprep.subr.bf16.mxu0 0
    %744 = vmatpush2.bf16.msra.mxu0 0
    %745 = vmatprep.subr.bf16.mxu0 0
    %746 = vmatpush2.bf16.msra.mxu0 0
    %747 = vmatprep.subr.bf16.mxu0 0
    %748 = vmatpush2.bf16.msra.mxu0 0
    %749 = vmatprep.subr.bf16.mxu0 0
    %750 = vmatpush2.bf16.msra.mxu0 0
    %751 = vmatprep.subr.bf16.mxu0 0
    %752 = vmatpush2.bf16.msra.mxu0 0
    %753 = vmatprep.subr.bf16.mxu0 0
    %754 = vmatpush2.bf16.msra.mxu0 0
    %755 = vmatprep.subr.bf16.mxu0 0
    %756 = vmatpush2.bf16.msra.mxu0 0
    %757 = vmatprep.mubr.bf16.mxu0 0
    %758 = vmatmul.mubr.bf16.gmra.mxu0 %v683
    %v759 = vpop.f32.mrf.mxu0
    %v760 = vadd.f32 0.0, %v759
    %v761 = vpop.f32.mrf.mxu0
    %v762 = vadd.f32 0.0, %v761
    %v763 = vpop.f32.mrf.mxu0
    %v764 = vpop.f32.mrf.mxu0
    %765 = vdwg.mxu0
    %v766 = vadd.f32 %v169, %v719
    %v767 = vadd.f32 %v171, %v721
    %v768 = vadd.f32 %v242, %v760
    %v769 = vadd.f32 %v244, %v762
    %v770 = vxor.u32 %v766, 2147483648
    %v771 = vxor.u32 %v767, 2147483648
    %v772 = vxor.u32 %v768, 2147483648
    %v773 = vmul.f32 %v770, 1.442695
    %v774 = vpow.pop %v773
    %v775 = vmul.f32 %v771, 1.442695
    %v776 = vpow.pop %v775
    %v777 = vmul.f32 %v772, 1.442695
    %v778 = vpow.pop %v777
    %v779 = vadd.f32 %v774, 1.0
    %v780 = vadd.f32 %v776, 1.0
    %v781 = vadd.f32 %v778, 1.0
    %v782 = vrcp.pop %v779
    %v783 = vmul.f32 1.0, %v782
    %v784 = vrcp.pop %v780
    %v785 = vmul.f32 1.0, %v784
    %v786 = vrcp.pop %v781
    %v787 = vmul.f32 1.0, %v786
    %v788 = vtanh.pop %v769
    %v789 = vmul.f32 %v785, %v680
    %v790 = vmul.f32 %v783, %v788
    %v791 = vadd.f32 %v789, %v790
    %v792 = vtanh.pop %v791
    %v793 = vmul.f32 %v787, %v792
    %v794 = vpack.c.bf16 %v793, %v793
    %795 = vmatprep.subr.bf16.mxu0 %v427
    %796 = vmatpush1.bf16.msra.mxu0 %v426
    %797 = vmatprep.subr.bf16.mxu0 %v423
    %798 = vmatpush1.bf16.msra.mxu0 %v422
    %799 = vmatprep.subr.bf16.mxu0 %v419
    %800 = vmatpush1.bf16.msra.mxu0 %v418
    %801 = vmatprep.subr.bf16.mxu0 %v415
    %802 = vmatpush1.bf16.msra.mxu0 %v414
    %803 = vmatprep.subr.bf16.mxu0 %v411
    %804 = vmatpush1.bf16.msra.mxu0 %v410
    %805 = vmatprep.subr.bf16.mxu0 %v407
    %806 = vmatpush1.bf16.msra.mxu0 %v406
    %807 = vmatprep.subr.bf16.mxu0 %v403
    %808 = vmatpush1.bf16.msra.mxu0 %v402
    %809 = vmatprep.subr.bf16.mxu0 %v399
    %810 = vmatpush1.bf16.msra.mxu0 %v398
    %811 = vmatprep.subr.bf16.mxu0 0
    %812 = vmatpush2.bf16.msra.mxu0 0
    %813 = vmatprep.subr.bf16.mxu0 0
    %814 = vmatpush2.bf16.msra.mxu0 0
    %815 = vmatprep.subr.bf16.mxu0 0
    %816 = vmatpush2.bf16.msra.mxu0 0
    %817 = vmatprep.subr.bf16.mxu0 0
    %818 = vmatpush2.bf16.msra.mxu0 0
    %819 = vmatprep.subr.bf16.mxu0 0
    %820 = vmatpush2.bf16.msra.mxu0 0
    %821 = vmatprep.subr.bf16.mxu0 0
    %822 = vmatpush2.bf16.msra.mxu0 0
    %823 = vmatprep.subr.bf16.mxu0 0
    %824 = vmatpush2.bf16.msra.mxu0 0
    %825 = vmatprep.subr.bf16.mxu0 0
    %826 = vmatpush2.bf16.msra.mxu0 0
    %827 = vmatprep.mubr.bf16.mxu0 0
    %828 = vmatmul.mubr.bf16.gmra.mxu0 %v794
    %v829 = vpop.f32.mrf.mxu0
    %v830 = vadd.f32 0.0, %v829
    %v831 = vpop.f32.mrf.mxu0
    %v832 = vadd.f32 0.0, %v831
    %v833 = vpop.f32.mrf.mxu0
    %v834 = vpop.f32.mrf.mxu0
    %835 = vdwg.mxu0
    %836 = vmatprep.subr.bf16.mxu0 %v429
    %837 = vmatpush1.bf16.msra.mxu0 %v428
    %838 = vmatprep.subr.bf16.mxu0 %v425
    %839 = vmatpush1.bf16.msra.mxu0 %v424
    %840 = vmatprep.subr.bf16.mxu0 %v421
    %841 = vmatpush1.bf16.msra.mxu0 %v420
    %842 = vmatprep.subr.bf16.mxu0 %v417
    %843 = vmatpush1.bf16.msra.mxu0 %v416
    %844 = vmatprep.subr.bf16.mxu0 %v413
    %845 = vmatpush1.bf16.msra.mxu0 %v412
    %846 = vmatprep.subr.bf16.mxu0 %v409
    %847 = vmatpush1.bf16.msra.mxu0 %v408
    %848 = vmatprep.subr.bf16.mxu0 %v405
    %849 = vmatpush1.bf16.msra.mxu0 %v404
    %850 = vmatprep.subr.bf16.mxu0 %v401
    %851 = vmatpush1.bf16.msra.mxu0 %v400
    %852 = vmatprep.subr.bf16.mxu0 0
    %853 = vmatpush2.bf16.msra.mxu0 0
    %854 = vmatprep.subr.bf16.mxu0 0
    %855 = vmatpush2.bf16.msra.mxu0 0
    %856 = vmatprep.subr.bf16.mxu0 0
    %857 = vmatpush2.bf16.msra.mxu0 0
    %858 = vmatprep.subr.bf16.mxu0 0
    %859 = vmatpush2.bf16.msra.mxu0 0
    %860 = vmatprep.subr.bf16.mxu0 0
    %861 = vmatpush2.bf16.msra.mxu0 0
    %862 = vmatprep.subr.bf16.mxu0 0
    %863 = vmatpush2.bf16.msra.mxu0 0
    %864 = vmatprep.subr.bf16.mxu0 0
    %865 = vmatpush2.bf16.msra.mxu0 0
    %866 = vmatprep.subr.bf16.mxu0 0
    %867 = vmatpush2.bf16.msra.mxu0 0
    %868 = vmatprep.mubr.bf16.mxu0 0
    %869 = vmatmul.mubr.bf16.gmra.mxu0 %v794
    %v870 = vpop.f32.mrf.mxu0
    %v871 = vadd.f32 0.0, %v870
    %v872 = vpop.f32.mrf.mxu0
    %v873 = vadd.f32 0.0, %v872
    %v874 = vpop.f32.mrf.mxu0
    %v875 = vpop.f32.mrf.mxu0
    %876 = vdwg.mxu0
    %v877 = vadd.f32 %v173, %v830
    %v878 = vadd.f32 %v175, %v832
    %v879 = vadd.f32 %v246, %v871
    %v880 = vadd.f32 %v248, %v873
    %v881 = vxor.u32 %v877, 2147483648
    %v882 = vxor.u32 %v878, 2147483648
    %v883 = vxor.u32 %v879, 2147483648
    %v884 = vmul.f32 %v881, 1.442695
    %v885 = vpow.pop %v884
    %v886 = vmul.f32 %v882, 1.442695
    %v887 = vpow.pop %v886
    %v888 = vmul.f32 %v883, 1.442695
    %v889 = vpow.pop %v888
    %v890 = vadd.f32 %v885, 1.0
    %v891 = vadd.f32 %v887, 1.0
    %v892 = vadd.f32 %v889, 1.0
    %v893 = vrcp.pop %v890
    %v894 = vmul.f32 1.0, %v893
    %v895 = vrcp.pop %v891
    %v896 = vmul.f32 1.0, %v895
    %v897 = vrcp.pop %v892
    %v898 = vmul.f32 1.0, %v897
    %v899 = vtanh.pop %v880
    %v900 = vmul.f32 %v896, %v791
    %v901 = vmul.f32 %v894, %v899
    %v902 = vadd.f32 %v900, %v901
    %v903 = vtanh.pop %v902
    %v904 = vmul.f32 %v898, %v903
    %v905 = vpack.c.bf16 %v904, %v904
    %906 = vmatprep.subr.bf16.mxu0 %v427
    %907 = vmatpush1.bf16.msra.mxu0 %v426
    %908 = vmatprep.subr.bf16.mxu0 %v423
    %909 = vmatpush1.bf16.msra.mxu0 %v422
    %910 = vmatprep.subr.bf16.mxu0 %v419
    %911 = vmatpush1.bf16.msra.mxu0 %v418
    %912 = vmatprep.subr.bf16.mxu0 %v415
    %913 = vmatpush1.bf16.msra.mxu0 %v414
    %914 = vmatprep.subr.bf16.mxu0 %v411
    %915 = vmatpush1.bf16.msra.mxu0 %v410
    %916 = vmatprep.subr.bf16.mxu0 %v407
    %917 = vmatpush1.bf16.msra.mxu0 %v406
    %918 = vmatprep.subr.bf16.mxu0 %v403
    %919 = vmatpush1.bf16.msra.mxu0 %v402
    %920 = vmatprep.subr.bf16.mxu0 %v399
    %921 = vmatpush1.bf16.msra.mxu0 %v398
    %922 = vmatprep.subr.bf16.mxu0 0
    %923 = vmatpush2.bf16.msra.mxu0 0
    %924 = vmatprep.subr.bf16.mxu0 0
    %925 = vmatpush2.bf16.msra.mxu0 0
    %926 = vmatprep.subr.bf16.mxu0 0
    %927 = vmatpush2.bf16.msra.mxu0 0
    %928 = vmatprep.subr.bf16.mxu0 0
    %929 = vmatpush2.bf16.msra.mxu0 0
    %930 = vmatprep.subr.bf16.mxu0 0
    %931 = vmatpush2.bf16.msra.mxu0 0
    %932 = vmatprep.subr.bf16.mxu0 0
    %933 = vmatpush2.bf16.msra.mxu0 0
    %934 = vmatprep.subr.bf16.mxu0 0
    %935 = vmatpush2.bf16.msra.mxu0 0
    %936 = vmatprep.subr.bf16.mxu0 0
    %937 = vmatpush2.bf16.msra.mxu0 0
    %938 = vmatprep.mubr.bf16.mxu0 0
    %939 = vmatmul.mubr.bf16.gmra.mxu0 %v905
    %v940 = vpop.f32.mrf.mxu0
    %v941 = vadd.f32 0.0, %v940
    %v942 = vpop.f32.mrf.mxu0
    %v943 = vadd.f32 0.0, %v942
    %v944 = vpop.f32.mrf.mxu0
    %v945 = vpop.f32.mrf.mxu0
    %946 = vdwg.mxu0
    %947 = vmatprep.subr.bf16.mxu0 %v429
    %948 = vmatpush1.bf16.msra.mxu0 %v428
    %949 = vmatprep.subr.bf16.mxu0 %v425
    %950 = vmatpush1.bf16.msra.mxu0 %v424
    %951 = vmatprep.subr.bf16.mxu0 %v421
    %952 = vmatpush1.bf16.msra.mxu0 %v420
    %953 = vmatprep.subr.bf16.mxu0 %v417
    %954 = vmatpush1.bf16.msra.mxu0 %v416
    %955 = vmatprep.subr.bf16.mxu0 %v413
    %956 = vmatpush1.bf16.msra.mxu0 %v412
    %957 = vmatprep.subr.bf16.mxu0 %v409
    %958 = vmatpush1.bf16.msra.mxu0 %v408
    %959 = vmatprep.subr.bf16.mxu0 %v405
    %960 = vmatpush1.bf16.msra.mxu0 %v404
    %961 = vmatprep.subr.bf16.mxu0 %v401
    %962 = vmatpush1.bf16.msra.mxu0 %v400
    %963 = vmatprep.subr.bf16.mxu0 0
    %964 = vmatpush2.bf16.msra.mxu0 0
    %965 = vmatprep.subr.bf16.mxu0 0
    %966 = vmatpush2.bf16.msra.mxu0 0
    %967 = vmatprep.subr.bf16.mxu0 0
    %968 = vmatpush2.bf16.msra.mxu0 0
    %969 = vmatprep.subr.bf16.mxu0 0
    %970 = vmatpush2.bf16.msra.mxu0 0
    %971 = vmatprep.subr.bf16.mxu0 0
    %972 = vmatpush2.bf16.msra.mxu0 0
    %973 = vmatprep.subr.bf16.mxu0 0
    %974 = vmatpush2.bf16.msra.mxu0 0
    %975 = vmatprep.subr.bf16.mxu0 0
    %976 = vmatpush2.bf16.msra.mxu0 0
    %977 = vmatprep.subr.bf16.mxu0 0
    %978 = vmatpush2.bf16.msra.mxu0 0
    %979 = vmatprep.mubr.bf16.mxu0 0
    %980 = vmatmul.mubr.bf16.gmra.mxu0 %v905
    %v981 = vpop.f32.mrf.mxu0
    %v982 = vadd.f32 0.0, %v981
    %v983 = vpop.f32.mrf.mxu0
    %v984 = vadd.f32 0.0, %v983
    %v985 = vpop.f32.mrf.mxu0
    %v986 = vpop.f32.mrf.mxu0
    %987 = vdwg.mxu0
    %v988 = vadd.f32 %v179, %v941
    %v989 = vadd.f32 %v181, %v943
    %v990 = vadd.f32 %v252, %v982
    %v991 = vadd.f32 %v254, %v984
    %v992 = vxor.u32 %v988, 2147483648
    %v993 = vxor.u32 %v989, 2147483648
    %v994 = vxor.u32 %v990, 2147483648
    %v995 = vmul.f32 %v992, 1.442695
    %v996 = vpow.pop %v995
    %v997 = vmul.f32 %v993, 1.442695
    %v998 = vpow.pop %v997
    %v999 = vmul.f32 %v994, 1.442695
    %v1000 = vpow.pop %v999
    %v1001 = vadd.f32 %v996, 1.0
    %v1002 = vadd.f32 %v998, 1.0
    %v1003 = vadd.f32 %v1000, 1.0
    %v1004 = vrcp.pop %v1001
    %v1005 = vmul.f32 1.0, %v1004
    %v1006 = vrcp.pop %v1002
    %v1007 = vmul.f32 1.0, %v1006
    %v1008 = vrcp.pop %v1003
    %v1009 = vmul.f32 1.0, %v1008
    %v1010 = vtanh.pop %v991
    %v1011 = vmul.f32 %v1007, %v902
    %v1012 = vmul.f32 %v1005, %v1010
    %v1013 = vadd.f32 %v1011, %v1012
    %v1014 = vtanh.pop %v1013
    %v1015 = vmul.f32 %v1009, %v1014
    %v1016 = vpack.c.bf16 %v1015, %v1015
    %1017 = vmatprep.subr.bf16.mxu0 %v427
    %1018 = vmatpush1.bf16.msra.mxu0 %v426
    %1019 = vmatprep.subr.bf16.mxu0 %v423
    %1020 = vmatpush1.bf16.msra.mxu0 %v422
    %1021 = vmatprep.subr.bf16.mxu0 %v419
    %1022 = vmatpush1.bf16.msra.mxu0 %v418
    %1023 = vmatprep.subr.bf16.mxu0 %v415
    %1024 = vmatpush1.bf16.msra.mxu0 %v414
    %1025 = vmatprep.subr.bf16.mxu0 %v411
    %1026 = vmatpush1.bf16.msra.mxu0 %v410
    %1027 = vmatprep.subr.bf16.mxu0 %v407
    %1028 = vmatpush1.bf16.msra.mxu0 %v406
    %1029 = vmatprep.subr.bf16.mxu0 %v403
    %1030 = vmatpush1.bf16.msra.mxu0 %v402
    %1031 = vmatprep.subr.bf16.mxu0 %v399
    %1032 = vmatpush1.bf16.msra.mxu0 %v398
    %1033 = vmatprep.subr.bf16.mxu0 0
    %1034 = vmatpush2.bf16.msra.mxu0 0
    %1035 = vmatprep.subr.bf16.mxu0 0
    %1036 = vmatpush2.bf16.msra.mxu0 0
    %1037 = vmatprep.subr.bf16.mxu0 0
    %1038 = vmatpush2.bf16.msra.mxu0 0
    %1039 = vmatprep.subr.bf16.mxu0 0
    %1040 = vmatpush2.bf16.msra.mxu0 0
    %1041 = vmatprep.subr.bf16.mxu0 0
    %1042 = vmatpush2.bf16.msra.mxu0 0
    %1043 = vmatprep.subr.bf16.mxu0 0
    %1044 = vmatpush2.bf16.msra.mxu0 0
    %1045 = vmatprep.subr.bf16.mxu0 0
    %1046 = vmatpush2.bf16.msra.mxu0 0
    %1047 = vmatprep.subr.bf16.mxu0 0
    %1048 = vmatpush2.bf16.msra.mxu0 0
    %1049 = vmatprep.mubr.bf16.mxu0 0
    %1050 = vmatmul.mubr.bf16.gmra.mxu0 %v1016
    %v1051 = vpop.f32.mrf.mxu0
    %v1052 = vadd.f32 0.0, %v1051
    %v1053 = vpop.f32.mrf.mxu0
    %v1054 = vadd.f32 0.0, %v1053
    %v1055 = vpop.f32.mrf.mxu0
    %v1056 = vpop.f32.mrf.mxu0
    %1057 = vdwg.mxu0
    %1058 = vmatprep.subr.bf16.mxu0 %v429
    %1059 = vmatpush1.bf16.msra.mxu0 %v428
    %1060 = vmatprep.subr.bf16.mxu0 %v425
    %1061 = vmatpush1.bf16.msra.mxu0 %v424
    %1062 = vmatprep.subr.bf16.mxu0 %v421
    %1063 = vmatpush1.bf16.msra.mxu0 %v420
    %1064 = vmatprep.subr.bf16.mxu0 %v417
    %1065 = vmatpush1.bf16.msra.mxu0 %v416
    %1066 = vmatprep.subr.bf16.mxu0 %v413
    %1067 = vmatpush1.bf16.msra.mxu0 %v412
    %1068 = vmatprep.subr.bf16.mxu0 %v409
    %1069 = vmatpush1.bf16.msra.mxu0 %v408
    %1070 = vmatprep.subr.bf16.mxu0 %v405
    %1071 = vmatpush1.bf16.msra.mxu0 %v404
    %1072 = vmatprep.subr.bf16.mxu0 %v401
    %1073 = vmatpush1.bf16.msra.mxu0 %v400
    %1074 = vmatprep.subr.bf16.mxu0 0
    %1075 = vmatpush2.bf16.msra.mxu0 0
    %1076 = vmatprep.subr.bf16.mxu0 0
    %1077 = vmatpush2.bf16.msra.mxu0 0
    %1078 = vmatprep.subr.bf16.mxu0 0
    %1079 = vmatpush2.bf16.msra.mxu0 0
    %1080 = vmatprep.subr.bf16.mxu0 0
    %1081 = vmatpush2.bf16.msra.mxu0 0
    %1082 = vmatprep.subr.bf16.mxu0 0
    %1083 = vmatpush2.bf16.msra.mxu0 0
    %1084 = vmatprep.subr.bf16.mxu0 0
    %1085 = vmatpush2.bf16.msra.mxu0 0
    %1086 = vmatprep.subr.bf16.mxu0 0
    %1087 = vmatpush2.bf16.msra.mxu0 0
    %1088 = vmatprep.subr.bf16.mxu0 0
    %1089 = vmatpush2.bf16.msra.mxu0 0
    %1090 = vmatprep.mubr.bf16.mxu0 0
    %1091 = vmatmul.mubr.bf16.gmra.mxu0 %v1016
    %v1092 = vpop.f32.mrf.mxu0
    %v1093 = vadd.f32 0.0, %v1092
    %v1094 = vpop.f32.mrf.mxu0
    %v1095 = vadd.f32 0.0, %v1094
    %v1096 = vpop.f32.mrf.mxu0
    %v1097 = vpop.f32.mrf.mxu0
    %1098 = vdwg.mxu0
    %v1099 = vadd.f32 %v183, %v1052
    %v1100 = vadd.f32 %v185, %v1054
    %v1101 = vadd.f32 %v256, %v1093
    %v1102 = vadd.f32 %v258, %v1095
    %v1103 = vxor.u32 %v1099, 2147483648
    %v1104 = vxor.u32 %v1100, 2147483648
    %v1105 = vxor.u32 %v1101, 2147483648
    %v1106 = vmul.f32 %v1103, 1.442695
    %v1107 = vpow.pop %v1106
    %v1108 = vmul.f32 %v1104, 1.442695
    %v1109 = vpow.pop %v1108
    %v1110 = vmul.f32 %v1105, 1.442695
    %v1111 = vpow.pop %v1110
    %v1112 = vadd.f32 %v1107, 1.0
    %v1113 = vadd.f32 %v1109, 1.0
    %v1114 = vadd.f32 %v1111, 1.0
    %v1115 = vrcp.pop %v1112
    %v1116 = vmul.f32 1.0, %v1115
    %v1117 = vrcp.pop %v1113
    %v1118 = vmul.f32 1.0, %v1117
    %v1119 = vrcp.pop %v1114
    %v1120 = vmul.f32 1.0, %v1119
    %v1121 = vtanh.pop %v1102
    %v1122 = vmul.f32 %v1118, %v1013
    %v1123 = vmul.f32 %v1116, %v1121
    %v1124 = vadd.f32 %v1122, %v1123
    %v1125 = vtanh.pop %v1124
    %v1126 = vmul.f32 %v1120, %v1125
    %v1127 = vpack.c.bf16 %v1126, %v1126
    %1128 = vmatprep.subr.bf16.mxu0 %v427
    %1129 = vmatpush1.bf16.msra.mxu0 %v426
    %1130 = vmatprep.subr.bf16.mxu0 %v423
    %1131 = vmatpush1.bf16.msra.mxu0 %v422
    %1132 = vmatprep.subr.bf16.mxu0 %v419
    %1133 = vmatpush1.bf16.msra.mxu0 %v418
    %1134 = vmatprep.subr.bf16.mxu0 %v415
    %1135 = vmatpush1.bf16.msra.mxu0 %v414
    %1136 = vmatprep.subr.bf16.mxu0 %v411
    %1137 = vmatpush1.bf16.msra.mxu0 %v410
    %1138 = vmatprep.subr.bf16.mxu0 %v407
    %1139 = vmatpush1.bf16.msra.mxu0 %v406
    %1140 = vmatprep.subr.bf16.mxu0 %v403
    %1141 = vmatpush1.bf16.msra.mxu0 %v402
    %1142 = vmatprep.subr.bf16.mxu0 %v399
    %1143 = vmatpush1.bf16.msra.mxu0 %v398
    %1144 = vmatprep.subr.bf16.mxu0 0
    %1145 = vmatpush2.bf16.msra.mxu0 0
    %1146 = vmatprep.subr.bf16.mxu0 0
    %1147 = vmatpush2.bf16.msra.mxu0 0
    %1148 = vmatprep.subr.bf16.mxu0 0
    %1149 = vmatpush2.bf16.msra.mxu0 0
    %1150 = vmatprep.subr.bf16.mxu0 0
    %1151 = vmatpush2.bf16.msra.mxu0 0
    %1152 = vmatprep.subr.bf16.mxu0 0
    %1153 = vmatpush2.bf16.msra.mxu0 0
    %1154 = vmatprep.subr.bf16.mxu0 0
    %1155 = vmatpush2.bf16.msra.mxu0 0
    %1156 = vmatprep.subr.bf16.mxu0 0
    %1157 = vmatpush2.bf16.msra.mxu0 0
    %1158 = vmatprep.subr.bf16.mxu0 0
    %1159 = vmatpush2.bf16.msra.mxu0 0
    %1160 = vmatprep.mubr.bf16.mxu0 0
    %1161 = vmatmul.mubr.bf16.gmra.mxu0 %v1127
    %v1162 = vpop.f32.mrf.mxu0
    %v1163 = vadd.f32 0.0, %v1162
    %v1164 = vpop.f32.mrf.mxu0
    %v1165 = vadd.f32 0.0, %v1164
    %v1166 = vpop.f32.mrf.mxu0
    %v1167 = vpop.f32.mrf.mxu0
    %1168 = vdwg.mxu0
    %1169 = vmatprep.subr.bf16.mxu0 %v429
    %1170 = vmatpush1.bf16.msra.mxu0 %v428
    %1171 = vmatprep.subr.bf16.mxu0 %v425
    %1172 = vmatpush1.bf16.msra.mxu0 %v424
    %1173 = vmatprep.subr.bf16.mxu0 %v421
    %1174 = vmatpush1.bf16.msra.mxu0 %v420
    %1175 = vmatprep.subr.bf16.mxu0 %v417
    %1176 = vmatpush1.bf16.msra.mxu0 %v416
    %1177 = vmatprep.subr.bf16.mxu0 %v413
    %1178 = vmatpush1.bf16.msra.mxu0 %v412
    %1179 = vmatprep.subr.bf16.mxu0 %v409
    %1180 = vmatpush1.bf16.msra.mxu0 %v408
    %1181 = vmatprep.subr.bf16.mxu0 %v405
    %1182 = vmatpush1.bf16.msra.mxu0 %v404
    %1183 = vmatprep.subr.bf16.mxu0 %v401
    %1184 = vmatpush1.bf16.msra.mxu0 %v400
    %1185 = vmatprep.subr.bf16.mxu0 0
    %1186 = vmatpush2.bf16.msra.mxu0 0
    %1187 = vmatprep.subr.bf16.mxu0 0
    %1188 = vmatpush2.bf16.msra.mxu0 0
    %1189 = vmatprep.subr.bf16.mxu0 0
    %1190 = vmatpush2.bf16.msra.mxu0 0
    %1191 = vmatprep.subr.bf16.mxu0 0
    %1192 = vmatpush2.bf16.msra.mxu0 0
    %1193 = vmatprep.subr.bf16.mxu0 0
    %1194 = vmatpush2.bf16.msra.mxu0 0
    %1195 = vmatprep.subr.bf16.mxu0 0
    %1196 = vmatpush2.bf16.msra.mxu0 0
    %1197 = vmatprep.subr.bf16.mxu0 0
    %1198 = vmatpush2.bf16.msra.mxu0 0
    %1199 = vmatprep.subr.bf16.mxu0 0
    %1200 = vmatpush2.bf16.msra.mxu0 0
    %1201 = vmatprep.mubr.bf16.mxu0 0
    %1202 = vmatmul.mubr.bf16.gmra.mxu0 %v1127
    %v1203 = vpop.f32.mrf.mxu0
    %v1204 = vadd.f32 0.0, %v1203
    %v1205 = vpop.f32.mrf.mxu0
    %v1206 = vadd.f32 0.0, %v1205
    %v1207 = vpop.f32.mrf.mxu0
    %v1208 = vpop.f32.mrf.mxu0
    %1209 = vdwg.mxu0
    %v1210 = vadd.f32 %v189, %v1163
    %v1211 = vadd.f32 %v191, %v1165
    %v1212 = vadd.f32 %v262, %v1204
    %v1213 = vadd.f32 %v264, %v1206
    %v1214 = vxor.u32 %v1210, 2147483648
    %v1215 = vxor.u32 %v1211, 2147483648
    %v1216 = vxor.u32 %v1212, 2147483648
    %v1217 = vmul.f32 %v1214, 1.442695
    %v1218 = vpow.pop %v1217
    %v1219 = vmul.f32 %v1215, 1.442695
    %v1220 = vpow.pop %v1219
    %v1221 = vmul.f32 %v1216, 1.442695
    %v1222 = vpow.pop %v1221
    %v1223 = vadd.f32 %v1218, 1.0
    %v1224 = vadd.f32 %v1220, 1.0
    %v1225 = vadd.f32 %v1222, 1.0
    %v1226 = vrcp.pop %v1223
    %v1227 = vmul.f32 1.0, %v1226
    %v1228 = vrcp.pop %v1224
    %v1229 = vmul.f32 1.0, %v1228
    %v1230 = vrcp.pop %v1225
    %v1231 = vmul.f32 1.0, %v1230
    %v1232 = vtanh.pop %v1213
    %v1233 = vmul.f32 %v1229, %v1124
    %v1234 = vmul.f32 %v1227, %v1232
    %v1235 = vadd.f32 %v1233, %v1234
    %v1236 = vtanh.pop %v1235
    %v1237 = vmul.f32 %v1231, %v1236
    %v1238 = vpack.c.bf16 %v1237, %v1237
    %1239 = vmatprep.subr.bf16.mxu0 %v427
    %1240 = vmatpush1.bf16.msra.mxu0 %v426
    %1241 = vmatprep.subr.bf16.mxu0 %v423
    %1242 = vmatpush1.bf16.msra.mxu0 %v422
    %1243 = vmatprep.subr.bf16.mxu0 %v419
    %1244 = vmatpush1.bf16.msra.mxu0 %v418
    %1245 = vmatprep.subr.bf16.mxu0 %v415
    %1246 = vmatpush1.bf16.msra.mxu0 %v414
    %1247 = vmatprep.subr.bf16.mxu0 %v411
    %1248 = vmatpush1.bf16.msra.mxu0 %v410
    %1249 = vmatprep.subr.bf16.mxu0 %v407
    %1250 = vmatpush1.bf16.msra.mxu0 %v406
    %1251 = vmatprep.subr.bf16.mxu0 %v403
    %1252 = vmatpush1.bf16.msra.mxu0 %v402
    %1253 = vmatprep.subr.bf16.mxu0 %v399
    %1254 = vmatpush1.bf16.msra.mxu0 %v398
    %1255 = vmatprep.subr.bf16.mxu0 0
    %1256 = vmatpush2.bf16.msra.mxu0 0
    %1257 = vmatprep.subr.bf16.mxu0 0
    %1258 = vmatpush2.bf16.msra.mxu0 0
    %1259 = vmatprep.subr.bf16.mxu0 0
    %1260 = vmatpush2.bf16.msra.mxu0 0
    %1261 = vmatprep.subr.bf16.mxu0 0
    %1262 = vmatpush2.bf16.msra.mxu0 0
    %1263 = vmatprep.subr.bf16.mxu0 0
    %1264 = vmatpush2.bf16.msra.mxu0 0
    %1265 = vmatprep.subr.bf16.mxu0 0
    %1266 = vmatpush2.bf16.msra.mxu0 0
    %1267 = vmatprep.subr.bf16.mxu0 0
    %1268 = vmatpush2.bf16.msra.mxu0 0
    %1269 = vmatprep.subr.bf16.mxu0 0
    %1270 = vmatpush2.bf16.msra.mxu0 0
    %1271 = vmatprep.mubr.bf16.mxu0 0
    %1272 = vmatmul.mubr.bf16.gmra.mxu0 %v1238
    %v1273 = vpop.f32.mrf.mxu0
    %v1274 = vadd.f32 0.0, %v1273
    %v1275 = vpop.f32.mrf.mxu0
    %v1276 = vadd.f32 0.0, %v1275
    %v1277 = vpop.f32.mrf.mxu0
    %v1278 = vpop.f32.mrf.mxu0
    %1279 = vdwg.mxu0
    %1280 = vmatprep.subr.bf16.mxu0 %v429
    %1281 = vmatpush1.bf16.msra.mxu0 %v428
    %1282 = vmatprep.subr.bf16.mxu0 %v425
    %1283 = vmatpush1.bf16.msra.mxu0 %v424
    %1284 = vmatprep.subr.bf16.mxu0 %v421
    %1285 = vmatpush1.bf16.msra.mxu0 %v420
    %1286 = vmatprep.subr.bf16.mxu0 %v417
    %1287 = vmatpush1.bf16.msra.mxu0 %v416
    %1288 = vmatprep.subr.bf16.mxu0 %v413
    %1289 = vmatpush1.bf16.msra.mxu0 %v412
    %1290 = vmatprep.subr.bf16.mxu0 %v409
    %1291 = vmatpush1.bf16.msra.mxu0 %v408
    %1292 = vmatprep.subr.bf16.mxu0 %v405
    %1293 = vmatpush1.bf16.msra.mxu0 %v404
    %1294 = vmatprep.subr.bf16.mxu0 %v401
    %1295 = vmatpush1.bf16.msra.mxu0 %v400
    %1296 = vmatprep.subr.bf16.mxu0 0
    %1297 = vmatpush2.bf16.msra.mxu0 0
    %1298 = vmatprep.subr.bf16.mxu0 0
    %1299 = vmatpush2.bf16.msra.mxu0 0
    %1300 = vmatprep.subr.bf16.mxu0 0
    %1301 = vmatpush2.bf16.msra.mxu0 0
    %1302 = vmatprep.subr.bf16.mxu0 0
    %1303 = vmatpush2.bf16.msra.mxu0 0
    %1304 = vmatprep.subr.bf16.mxu0 0
    %1305 = vmatpush2.bf16.msra.mxu0 0
    %1306 = vmatprep.subr.bf16.mxu0 0
    %1307 = vmatpush2.bf16.msra.mxu0 0
    %1308 = vmatprep.subr.bf16.mxu0 0
    %1309 = vmatpush2.bf16.msra.mxu0 0
    %1310 = vmatprep.subr.bf16.mxu0 0
    %1311 = vmatpush2.bf16.msra.mxu0 0
    %1312 = vmatprep.mubr.bf16.mxu0 0
    %1313 = vmatmul.mubr.bf16.gmra.mxu0 %v1238
    %v1314 = vpop.f32.mrf.mxu0
    %v1315 = vadd.f32 0.0, %v1314
    %v1316 = vpop.f32.mrf.mxu0
    %v1317 = vadd.f32 0.0, %v1316
    %v1318 = vpop.f32.mrf.mxu0
    %v1319 = vpop.f32.mrf.mxu0
    %1320 = vdwg.mxu0
    %v1321 = vadd.f32 %v193, %v1274
    %v1322 = vadd.f32 %v195, %v1276
    %v1323 = vadd.f32 %v266, %v1315
    %v1324 = vadd.f32 %v268, %v1317
    %v1325 = vxor.u32 %v1321, 2147483648
    %v1326 = vxor.u32 %v1322, 2147483648
    %v1327 = vxor.u32 %v1323, 2147483648
    %v1328 = vmul.f32 %v1325, 1.442695
    %v1329 = vpow.pop %v1328
    %v1330 = vmul.f32 %v1326, 1.442695
    %v1331 = vpow.pop %v1330
    %v1332 = vmul.f32 %v1327, 1.442695
    %v1333 = vpow.pop %v1332
    %v1334 = vadd.f32 %v1329, 1.0
    %v1335 = vadd.f32 %v1331, 1.0
    %v1336 = vadd.f32 %v1333, 1.0
    %v1337 = vrcp.pop %v1334
    %v1338 = vmul.f32 1.0, %v1337
    %v1339 = vrcp.pop %v1335
    %v1340 = vmul.f32 1.0, %v1339
    %v1341 = vrcp.pop %v1336
    %v1342 = vmul.f32 1.0, %v1341
    %v1343 = vtanh.pop %v1324
    %v1344 = vmul.f32 %v1340, %v1235
    %v1345 = vmul.f32 %v1338, %v1343
    %v1346 = vadd.f32 %v1344, %v1345
    %v1347 = vtanh.pop %v1346
    %v1348 = vmul.f32 %v1342, %v1347
    %v1349 = vpack.c.bf16 %v1348, %v1348
    %v1350 = vld [vmem:[%s4] sm:$0xf]
    %v1351 = vld [vmem:[%s4 + $0x4] sm:$0xf]
    %v1352 = vld [vmem:[%s4 + $0x8] sm:$0xf]
    %v1353 = vld [vmem:[%s4 + $0xc] sm:$0xf]
    %v1354 = vld [vmem:[%s4 + $0x10] sm:$0xf]
    %v1355 = vld [vmem:[%s4 + $0x14] sm:$0xf]
    %v1356 = vld [vmem:[%s4 + $0x18] sm:$0xf]
    %v1357 = vld [vmem:[%s4 + $0x1c] sm:$0xf]
    %v1358 = vld [vmem:[%s4 + $0x20] sm:$0xf]
    %v1359 = vld [vmem:[%s4 + $0x24] sm:$0xf]
    %v1360 = vld [vmem:[%s4 + $0x28] sm:$0xf]
    %v1361 = vld [vmem:[%s4 + $0x2c] sm:$0xf]
    %v1362 = vld [vmem:[%s4 + $0x30] sm:$0xf]
    %v1363 = vld [vmem:[%s4 + $0x34] sm:$0xf]
    %v1364 = vld [vmem:[%s4 + $0x38] sm:$0xf]
    %v1365 = vld [vmem:[%s4 + $0x3c] sm:$0xf]
    %v1366 = vld [vmem:[%s5] sm:$0x1]
    %v1368 = vlaneseq
    %v1369 = vshrl.u32 %v1368, 7
    %v1370 = vsub.s32 0, %v1369
    %v1371 = vrot.slane %v1366, %v1370
    %v1389 = vunpack.c.l.b16 %v1350
    %v1390 = vunpack.c.l.b16 %v1351
    %v1391 = vunpack.c.l.b16 %v1352
    %v1392 = vunpack.c.l.b16 %v1353
    %v1393 = vunpack.c.l.b16 %v1354
    %v1394 = vunpack.c.l.b16 %v1355
    %v1395 = vunpack.c.l.b16 %v1356
    %v1396 = vunpack.c.l.b16 %v1357
    %v1397 = vunpack.c.l.b16 %v1358
    %v1398 = vunpack.c.l.b16 %v1359
    %v1399 = vunpack.c.l.b16 %v1360
    %v1400 = vunpack.c.l.b16 %v1361
    %v1401 = vunpack.c.l.b16 %v1362
    %v1402 = vunpack.c.l.b16 %v1363
    %v1403 = vunpack.c.l.b16 %v1364
    %v1404 = vunpack.c.l.b16 %v1365
    %v1405 = vpack.c.b16 %v1390, %v1389
    %v1406 = vpack.c.b16 %v1392, %v1391
    %v1407 = vpack.c.b16 %v1394, %v1393
    %v1408 = vpack.c.b16 %v1396, %v1395
    %v1409 = vpack.c.b16 %v1398, %v1397
    %v1410 = vpack.c.b16 %v1400, %v1399
    %v1411 = vpack.c.b16 %v1402, %v1401
    %v1412 = vpack.c.b16 %v1404, %v1403
    %1421 = vmatprep.subr.bf16.mxu0 0
    %1422 = vmatpush1.bf16.msra.mxu0 %v1412
    %1423 = vmatprep.subr.bf16.mxu0 0
    %1424 = vmatpush1.bf16.msra.mxu0 %v1411
    %1425 = vmatprep.subr.bf16.mxu0 0
    %1426 = vmatpush1.bf16.msra.mxu0 %v1410
    %1427 = vmatprep.subr.bf16.mxu0 0
    %1428 = vmatpush1.bf16.msra.mxu0 %v1409
    %1429 = vmatprep.subr.bf16.mxu0 0
    %1430 = vmatpush1.bf16.msra.mxu0 %v1408
    %1431 = vmatprep.subr.bf16.mxu0 0
    %1432 = vmatpush1.bf16.msra.mxu0 %v1407
    %1433 = vmatprep.subr.bf16.mxu0 0
    %1434 = vmatpush1.bf16.msra.mxu0 %v1406
    %1435 = vmatprep.subr.bf16.mxu0 0
    %1436 = vmatpush1.bf16.msra.mxu0 %v1405
    %1437 = vmatprep.subr.bf16.mxu0 0
    %1438 = vmatpush2.bf16.msra.mxu0 0
    %1439 = vmatprep.subr.bf16.mxu0 0
    %1440 = vmatpush2.bf16.msra.mxu0 0
    %1441 = vmatprep.subr.bf16.mxu0 0
    %1442 = vmatpush2.bf16.msra.mxu0 0
    %1443 = vmatprep.subr.bf16.mxu0 0
    %1444 = vmatpush2.bf16.msra.mxu0 0
    %1445 = vmatprep.subr.bf16.mxu0 0
    %1446 = vmatpush2.bf16.msra.mxu0 0
    %1447 = vmatprep.subr.bf16.mxu0 0
    %1448 = vmatpush2.bf16.msra.mxu0 0
    %1449 = vmatprep.subr.bf16.mxu0 0
    %1450 = vmatpush2.bf16.msra.mxu0 0
    %1451 = vmatprep.subr.bf16.mxu0 0
    %1452 = vmatpush2.bf16.msra.mxu0 0
    %1453 = vmatprep.mubr.bf16.mxu0 0
    %1454 = vmatmul.mubr.bf16.gmra.mxu0 %v1349
    %v1455 = vpop.f32.mrf.mxu0
    %v1456 = vadd.f32 %v1371, %v1455
    %v1457 = vpop.f32.mrf.mxu0
    %v1458 = vpop.f32.mrf.mxu0
    %v1459 = vpop.f32.mrf.mxu0
    %1460 = vdwg.mxu0
    %1461 = vst [vmem:[#allocation7] sm:$0xff] %v1456
    // Predicated region
    $region34: #{tpu_custom_call.1} parent=1 // pred_check
      _
    $region35: #{tpu_custom_call.1} parent=1 // pred_check_branch
      %1463 = sbr.rel (0) target = $region37
    $region36: #{tpu_custom_call.1} parent=1 // pred_region
      %s1465 = ssub.s32 128, 128
      %1466 = vsyncadd [#allocation4], %s1465
      %s1468 = sshll.u32 [#allocation7], 4
      %s1469 = int_to_ptr.vmem [resolvable:$true] %s1468
      %1471 = dma.vmem_to_hbm [thread:$0]  %s1469, 128, %s6, [#allocation4]
    $region37: #{tpu_custom_call.1} parent=1 // pred_fallthru
      _
    // Predicated region
    $region38: #{tpu_custom_call.1} parent=1 // pred_check
      _
    $region39: #{tpu_custom_call.1} parent=1 // pred_check_branch
      %1473 = sbr.rel (0) target = $region41
    $region40: #{tpu_custom_call.1} parent=1 // pred_region
      %1474 = dma.done [#allocation4], 128
    $region41: #{tpu_custom_call.1} parent=1 // pred_fallthru
      _
    %1475 = vsyncpa [#allocation3], 1
    %1476 = vsyncpa [#allocation6], 1
    %1477 = vsyncpa [#allocation4], 1

</llo_original>
